<compile_context>
chip_gen: v6e
topology: v6e:2x2x1
jax: 0.10.0
libtpu: 0.0.40
codegen_flags: <defaults>
</compile_context>

<pallas_src>
import functools

import jax
import jax.numpy as jnp
from jax.experimental import pallas as pl
from jax.experimental.pallas import tpu as pltpu

LRELU_SLOPE = 0.1
ACT_DTYPE = jnp.bfloat16     # inter-layer activation storage dtype
_HALO_G = 128                # lane granule used for halo neighbour blocks


# ------------------------------ VMEM budgeting ------------------------------ #

@functools.lru_cache(maxsize=1)
def _vmem_limit_bytes():
    """Generation-aware scoped-VMEM limit (~75% of per-core capacity)."""
    cap = None
    try:
        cap = int(pltpu.get_tpu_info().vmem_capacity_bytes)
    except Exception:
        cap = None
    if not cap or cap <= 0:
        cap = 64 << 20           # conservative fallback if the query is unavailable
    return max(32 << 20, min(cap * 3 // 4, 100 << 20))


def _tile_footprint_bytes(t, c_in, c_out, convs, n_add, pad_l, pad_r,
                          in_b, out_b, n_halo_blocks):
    """Conservative per-tile VMEM footprint: double-buffered pipeline blocks,
    resident weights (counted x2) and in-kernel temporaries."""
    halo = pad_l + pad_r
    dbuf = 2 * (c_in * t + n_halo_blocks * c_in * _HALO_G
                + n_add * c_out * t) * in_b
    dbuf += 2 * c_out * t * out_b
    wts = 0
    tmp = (3 * 2 + 2 * 4) * c_in * (t + halo)          # window copies (bf16 + f32)
    for (w3, b2, _taps, _dil) in convs:
        wts += 2 * (w3.size * 2 + b2.size * 4)
        co = w3.shape[1]
        tmp += 3 * co * (t + halo) * 4                 # per-stage acc / relayouts
    return dbuf + wts + tmp


def _pick_t_tile(T, c_in, c_out, convs, n_add, pad_l, pad_r, in_b, out_b):
    budget = _vmem_limit_bytes() // 2
    for t in (2048, 1024, 512, 256, 128):
        if T % t:
            continue
        n_halo = 2 if (T // t > 1 and (pad_l > 0 or pad_r > 0)) else 0
        if _tile_footprint_bytes(t, c_in, c_out, convs, n_add, pad_l, pad_r,
                                 in_b, out_b, n_halo) <= budget:
            return t
    for t in (512, 256, 128):
        if T % t == 0:
            return t
    return T   # tiny / odd T: single full-T tile (lane-masked stores; rare path)


# ------------------------------ Pallas kernel ------------------------------- #

def _fused_conv_kernel(*refs, conv_meta, t_tile, pad_l, pad_r, has_halo,
                       pre_slope, mid_slope, residual_from_window, n_add,
                       out_scale, apply_tanh, t_total):
    """Generic fused kernel:
       [leaky] -> conv_0 -> ([leaky] -> conv_1)? -> (+residual)(+adds)(*scale)(tanh)
    conv_meta: tuple of (taps, dilation) per conv stage."""
    i = 0
    x_ref = refs[i]; i += 1
    if has_halo:
        xl_ref, xr_ref = refs[i], refs[i + 1]; i += 2
    wb_refs = []
    for _ in conv_meta:
        wb_refs.append((refs[i], refs[i + 1])); i += 2
    add_refs = refs[i:i + n_add]
    o_ref = refs[i + n_add]

    t = pl.program_id(0)
    n_t = pl.num_programs(0)

    xc = x_ref[0]                                      # (C_in, t_tile)
    c_in = xc.shape[0]
    dt = xc.dtype

    # Halo'd window [left pad | tile | right pad].  The halo comes from the two
    # neighbouring 128-wide granules of x (clamped index_map) and is zeroed at
    # the array edges to implement 'same' zero padding.
    parts = []
    if pad_l > 0:
        if has_halo:
            lh = xl_ref[0, :, _HALO_G - pad_l:]
            lh = jnp.where(t > 0, lh, jnp.zeros_like(lh))
        else:
            lh = jnp.zeros((c_in, pad_l), dt)
        parts.append(lh)
    parts.append(xc)
    if pad_r > 0:
        if has_halo:
            rh = xr_ref[0, :, :pad_r]
            rh = jnp.where(t < n_t - 1, rh, jnp.zeros_like(rh))
        else:
            rh = jnp.zeros((c_in, pad_r), dt)
        parts.append(rh)
    cur = parts[0] if len(parts) == 1 else jnp.concatenate(parts, axis=-1)

    n_stage = len(conv_meta)
    acc = None
    for s, (taps, dil) in enumerate(conv_meta):
        w_ref, b_ref = wb_refs[s]
        slope = pre_slope if s == 0 else mid_slope
        a = cur
        if slope is not None:                          # leaky_relu (leaky(0)==0)
            a = jnp.where(a >= 0, a, a * slope)
        a = a.astype(jnp.bfloat16)
        out_w = cur.shape[1] - dil * (taps - 1)
        acc = None
        for k in range(taps):                          # K accumulating MXU dots
            d = jnp.dot(w_ref[k], a[:, k * dil:k * dil + out_w],
                        preferred_element_type=jnp.float32)
            acc = d if acc is None else acc + d
        acc = acc + b_ref[...]                         # (C_out, 1) broadcast
        if s < n_stage - 1:
            # Zero the extended columns that fall outside [0, T): the next
            # conv's 'same' padding must see zeros, not extrapolated outputs.
            ext = (out_w - t_tile) // 2
            if ext > 0:
                col = jax.lax.broadcasted_iota(jnp.int32, acc.shape, 1)
                pos = col + (t * t_tile - ext)
                acc = jnp.where((pos >= 0) & (pos < t_total), acc, 0.0)
            cur = acc

    out = acc                                          # (C_out, t_tile) f32
    if residual_from_window:                           # residual reuses the x tile
        out = out + xc.astype(jnp.float32)
    for a_ref in add_refs:                             # fused xs accumulation
        out = out + a_ref[0].astype(jnp.float32)
    if out_scale != 1.0:                               # fused /num_kernels
        out = out * out_scale
    if apply_tanh:
        out = jnp.tanh(out)
    o_ref[0] = out.astype(o_ref.dtype)


def _fused_conv(x, convs, *, pad_l, pad_r, pre_slope=None, mid_slope=None,
                residual_from_window=False, adds=(), out_scale=1.0,
                apply_tanh=False, out_dtype=ACT_DTYPE, c_out):
    """x: (B, C_in, T).  convs: list of (w3, b2, taps, dilation) with
    w3: (taps, C_out_s, C_in_s) bf16 and b2: (C_out_s, 1) f32.
    adds: tuple of (B, c_out, T) tensors added to the final conv output."""
    B, C_in, T = x.shape
    n_add = len(adds)
    if residual_from_window:
        assert c_out == C_in
    for a in adds:
        assert a.shape == (B, c_out, T)

    in_b = jnp.dtype(x.dtype).itemsize
    out_b = jnp.dtype(out_dtype).itemsize
    t_tile = _pick_t_tile(T, C_in, c_out, convs, n_add, pad_l, pad_r, in_b, out_b)
    n_t = T // t_tile
    has_halo = (n_t > 1) and (pad_l > 0 or pad_r > 0)
    if has_halo:
        assert t_tile % _HALO_G == 0 and pad_l <= _HALO_G and pad_r <= _HALO_G
    tpg = t_tile // _HALO_G if has_halo else 1
    n_g = T // _HALO_G if has_halo else 1

    kern = functools.partial(
        _fused_conv_kernel,
        conv_meta=tuple((taps, dil) for (_, _, taps, dil) in convs),
        t_tile=t_tile, pad_l=pad_l, pad_r=pad_r, has_halo=has_halo,
        pre_slope=pre_slope, mid_slope=mid_slope,
        residual_from_window=residual_from_window, n_add=n_add,
        out_scale=out_scale, apply_tanh=apply_tanh, t_total=T)

    in_specs = [pl.BlockSpec((1, C_in, t_tile), lambda t, b: (b, 0, t))]
    inputs = [x]
    if has_halo:
        in_specs.append(pl.BlockSpec(
            (1, C_in, _HALO_G),
            lambda t, b, _g=tpg: (b, 0, jnp.maximum(t * _g - 1, 0))))
        in_specs.append(pl.BlockSpec(
            (1, C_in, _HALO_G),
            lambda t, b, _g=tpg, _n=n_g: (b, 0, jnp.minimum((t + 1) * _g, _n - 1))))
        inputs += [x, x]
    for (w3, b2, _taps, _dil) in convs:                 # resident weights / bias
        in_specs.append(pl.BlockSpec(w3.shape, lambda t, b: (0, 0, 0)))
        in_specs.append(pl.BlockSpec(b2.shape, lambda t, b: (0, 0)))
        inputs += [w3, b2]
    for a in adds:
        in_specs.append(pl.BlockSpec((1, c_out, t_tile), lambda t, b: (b, 0, t)))
        inputs.append(a)

    return pl.pallas_call(
        kern,
        out_shape=jax.ShapeDtypeStruct((B, c_out, T), out_dtype),
        grid=(n_t, B),
        in_specs=in_specs,
        out_specs=pl.BlockSpec((1, c_out, t_tile), lambda t, b: (b, 0, t)),
        compiler_params=pltpu.CompilerParams(
            dimension_semantics=("parallel", "parallel"),
            vmem_limit_bytes=_vmem_limit_bytes()),
    )(*inputs)


# ------------------------------ conv wrappers -------------------------------- #

def _w3(w_pt):
    """PyTorch Conv1d weight (C_out, C_in, K) -> (K, C_out, C_in) bf16."""
    return jnp.transpose(w_pt, (2, 0, 1)).astype(jnp.bfloat16)


def _b2(b):
    return b.reshape(-1, 1).astype(jnp.float32)


def conv1d_same(x, w_pt, b, *, dilation=1, pre_slope=None, apply_tanh=False,
                adds=(), out_scale=1.0, out_dtype=ACT_DTYPE, residual=False):
    """PyTorch Conv1d(padding='same') fused with its element-wise glue."""
    C_out, C_in, K = w_pt.shape
    assert K % 2 == 1, "even kernel sizes need asymmetric 'same' padding (unsupported)"
    pad = dilation * (K - 1) // 2
    return _fused_conv(x, [(_w3(w_pt), _b2(b), K, dilation)], pad_l=pad,
                       pad_r=pad, pre_slope=pre_slope, apply_tanh=apply_tanh,
                       adds=adds, out_scale=out_scale, out_dtype=out_dtype,
                       residual_from_window=residual, c_out=C_out)


def conv_pair_residual(x, w1, b1, w2, b2, *, dilation, adds=(), out_scale=1.0,
                       out_dtype=ACT_DTYPE):
    """One fused ResBlock1 unit:
       leaky(0.1) -> conv1(dil) -> leaky(0.1) -> conv2 -> + x [+ adds] [* scale].
    The conv1 output stays in VMEM (computed on a window widened by conv2's pad)."""
    C_out, C_in, K = w1.shape
    assert K % 2 == 1 and C_out == C_in and w2.shape == (C_out, C_out, K)
    pad1 = dilation * (K - 1) // 2
    pad2 = (K - 1) // 2
    convs = [(_w3(w1), _b2(b1), K, dilation), (_w3(w2), _b2(b2), K, 1)]
    return _fused_conv(x, convs, pad_l=pad1 + pad2, pad_r=pad1 + pad2,
                       pre_slope=LRELU_SLOPE, mid_slope=LRELU_SLOPE,
                       residual_from_window=True, adds=adds,
                       out_scale=out_scale, out_dtype=out_dtype, c_out=C_out)


def conv_transpose1d_polyphase(x, w_pt, b, K, u, p, pre_slope=None):
    """PyTorch ConvTranspose1d via polyphase decomposition: all `u` output phases
    come from one fused conv over the ORIGINAL input (no zero insertion).
    w_pt: (C_in, C_out, K), b: (C_out,)."""
    B, C_in, T = x.shape
    C_out = w_pt.shape[1]
    T_out = (T - 1) * u - 2 * p + K
    # TODO(synk): general output_padding / T_out != stride*T not needed for HiFi-GAN.
    assert T_out == T * u, "only the HiFi-GAN case T_out == stride*T is supported"

    a_max = (K - 1 - p) // u
    a_min = -((u - 1 + p) // u)
    L = a_max - a_min + 1
    taps = []
    for k in range(L):
        blocks = []
        for r in range(u):
            kk = (a_max - k) * u + r + p
            if 0 <= kk < K:
                blocks.append(jnp.transpose(w_pt[:, :, kk], (1, 0)))   # (C_out, C_in)
            else:
                blocks.append(jnp.zeros((C_out, C_in), w_pt.dtype))
        taps.append(jnp.concatenate(blocks, axis=0))                    # (u*C_out, C_in)
    w3 = jnp.stack(taps, axis=0).astype(jnp.bfloat16)                   # (L, u*C_out, C_in)
    b2 = jnp.tile(b.reshape(C_out, 1), (u, 1)).astype(jnp.float32)

    y = _fused_conv(x, [(w3, b2, L, 1)], pad_l=a_max, pad_r=-a_min,
                    pre_slope=pre_slope, out_dtype=ACT_DTYPE, c_out=u * C_out)
    # Phase-major (B, u*C_out, T) -> interleaved time (B, C_out, u*T).
    # TODO(synk): interleave phases in-kernel (strided lane sub-stores) to drop this
    #             XLA transpose; it already moves half the bytes since y is bf16.
    return y.reshape(B, u, C_out, T).transpose(0, 2, 3, 1).reshape(B, C_out, u * T)


# -------------------------------- ResBlocks ---------------------------------- #

def _resblock1_fused(x, p, kernel_size, dilation, xs, final_scale):
    n = len(dilation)
    for m, d in enumerate(dilation):
        w1, b1 = p['convs1'][m]
        w2, b2 = p['convs2'][m]
        last = (m == n - 1)
        adds = (xs,) if (last and xs is not None) else ()
        scale = final_scale if last else 1.0
        x = conv_pair_residual(x, w1, b1, w2, b2, dilation=d, adds=adds,
                               out_scale=scale)
    return x


def _resblock2_fused(x, p, kernel_size, dilation, xs, final_scale):
    n = len(dilation)
    for m, d in enumerate(dilation):
        w, b = p['convs'][m]
        last = (m == n - 1)
        adds = (xs,) if (last and xs is not None) else ()
        scale = final_scale if last else 1.0
        x = conv1d_same(x, w, b, dilation=d, pre_slope=LRELU_SLOPE, adds=adds,
                        out_scale=scale, residual=True)
    return x


# -------------------------------- Generator ---------------------------------- #

def generator_forward(x, params, h):
    num_kernels = len(h['resblock_kernel_sizes'])
    num_upsamples = len(h['upsample_rates'])

    w, b = params['conv_pre']
    x = conv1d_same(x, w, b)                                   # -> bf16 activations

    for i in range(num_upsamples):
        u = h['upsample_rates'][i]
        k = h['upsample_kernel_sizes'][i]
        wu, bu = params['ups'][i]
        # F.leaky_relu(LRELU_SLOPE) is fused as the up-conv's pre-activation.
        x = conv_transpose1d_polyphase(x, wu, bu, k, u, (k - u) // 2,
                                       pre_slope=LRELU_SLOPE)
        xs = None
        for j in range(num_kernels):
            rk = h['resblock_kernel_sizes'][j]
            rd = h['resblock_dilation_sizes'][j]
            rp = params['resblocks'][i * num_kernels + j]
            scale = 1.0 / num_kernels if j == num_kernels - 1 else 1.0
            if h['resblock'] == '1':
                xs = _resblock1_fused(x, rp, rk, rd, xs, scale)
            else:
                xs = _resblock2_fused(x, rp, rk, rd, xs, scale)
        x = xs

    # F.leaky_relu (default 0.01) + conv_post (1-row MXU dot) + tanh, all fused.
    w, b = params['conv_post']
    return conv1d_same(x, w, b, pre_slope=0.01, apply_tanh=True,
                       out_dtype=jnp.float32)


# ------------------------------- init params --------------------------------- #

def init_params(key, h):
    keys = iter(jax.random.split(key, 512))

    def cw(c_out, c_in, k):
        return 0.01 * jax.random.normal(next(keys), (c_out, c_in, k), jnp.float32)

    def cb(c_out):
        return 0.01 * jax.random.normal(next(keys), (c_out,), jnp.float32)

    c_base = h['upsample_initial_channel']
    p = {'conv_pre': (cw(c_base, 80, 7), cb(c_base)), 'ups': [], 'resblocks': []}

    for i, (u, k) in enumerate(zip(h['upsample_rates'], h['upsample_kernel_sizes'])):
        c_in = c_base // 2 ** i
        c_out = c_base // 2 ** (i + 1)
        wt = 0.01 * jax.random.normal(next(keys), (c_in, c_out, k), jnp.float32)
        p['ups'].append((wt, cb(c_out)))

    ch = c_base
    for i in range(len(h['upsample_rates'])):
        ch = c_base // 2 ** (i + 1)
        for rk, rd in zip(h['resblock_kernel_sizes'], h['resblock_dilation_sizes']):
            if h['resblock'] == '1':
                rb = {'convs1': [(cw(ch, ch, rk), cb(ch)) for _ in rd],
                      'convs2': [(cw(ch, ch, rk), cb(ch)) for _ in rd]}
            else:
                rb = {'convs': [(cw(ch, ch, rk), cb(ch)) for _ in rd]}
            p['resblocks'].append(rb)

    p['conv_post'] = (cw(1, ch, 7), cb(1))
    return p


# ----------------------- pure-JAX reference (for checking) ------------------- #

def _ref_leaky(x, s):
    return jnp.where(x >= 0, x, s * x)


def _ref_conv1d(x, w, b, dilation=1):
    C_out, C_in, K = w.shape
    T = x.shape[2]
    pad = dilation * (K - 1) // 2
    xp = jnp.pad(x, ((0, 0), (0, 0), (pad, pad)))
    out = jnp.broadcast_to(b[None, :, None], (x.shape[0], C_out, T)).astype(jnp.float32)
    for k in range(K):
        out = out + jnp.einsum('oi,bit->bot', w[:, :, k],
                               xp[:, :, k * dilation:k * dilation + T],
                               precision=jax.lax.Precision.HIGHEST)
    return out


def _ref_conv_transpose1d(x, w, b, K, u, p):
    B, C_in, T = x.shape
    C_out = w.shape[1]
    T_out = (T - 1) * u - 2 * p + K
    xd = jnp.zeros((B, C_in, (T - 1) * u + 1), x.dtype).at[:, :, ::u].set(x)
    edge = K - 1 - p
    xp = jnp.pad(xd, ((0, 0), (0, 0), (edge, edge)))
    wf = jnp.flip(w, axis=2)
    out = jnp.broadcast_to(b[None, :, None], (B, C_out, T_out)).astype(jnp.float32)
    for k in range(K):
        out = out + jnp.einsum('io,bit->bot', wf[:, :, k], xp[:, :, k:k + T_out],
                               precision=jax.lax.Precision.HIGHEST)
    return out


def _ref_resblock1(x, p, dilation):
    for (w1, b1), (w2, b2), d in zip(p['convs1'], p['convs2'], dilation):
        xt = _ref_conv1d(_ref_leaky(x, LRELU_SLOPE), w1, b1, d)
        xt = _ref_conv1d(_ref_leaky(xt, LRELU_SLOPE), w2, b2, 1)
        x = xt + x
    return x


def _ref_resblock2(x, p, dilation):
    for (w, b), d in zip(p['convs'], dilation):
        xt = _ref_conv1d(_ref_leaky(x, LRELU_SLOPE), w, b, d)
        x = xt + x
    return x


def ref_generator_forward(x, params, h):
    num_kernels = len(h['resblock_kernel_sizes'])
    w, b = params['conv_pre']
    x = _ref_conv1d(x, w, b, 1)
    for i in range(len(h['upsample_rates'])):
        u = h['upsample_rates'][i]
        k = h['upsample_kernel_sizes'][i]
        wu, bu = params['ups'][i]
        x = _ref_conv_transpose1d(_ref_leaky(x, LRELU_SLOPE), wu, bu, k, u,
                                  (k - u) // 2)
        xs = None
        for j in range(num_kernels):
            rd = h['resblock_dilation_sizes'][j]
            rp = params['resblocks'][i * num_kernels + j]
            r = (_ref_resblock1(x, rp, rd) if h['resblock'] == '1'
                 else _ref_resblock2(x, rp, rd))
            xs = r if xs is None else xs + r
        x = xs / num_kernels
    w, b = params['conv_post']
    return jnp.tanh(_ref_conv1d(_ref_leaky(x, 0.01), w, b, 1))


# ----------------------------------- main ------------------------------------ #

if __name__ == "__main__":
    h = dict(
        resblock='1',
        resblock_kernel_sizes=[3, 5],
        resblock_dilation_sizes=[[1, 3, 5], [1, 3, 5]],
        upsample_rates=[2, 2],
        upsample_kernel_sizes=[4, 4],
        upsample_initial_channel=32,
    )

    key = jax.random.PRNGKey(0)
    pkey, xkey, xkey2 = jax.random.split(key, 3)
    params = init_params(pkey, h)

    up_total = 1
    for u in h['upsample_rates']:
        up_total *= u

    # Case 1: T multiple of 128 -> tiled halo path (multi-tile grid everywhere).
    B, T = 2, 384
    x = jax.random.normal(xkey, (B, 80, T), jnp.float32)
    y = jax.block_until_ready(generator_forward(x, params, h))
    assert y.shape == (B, 1, T * up_total), y.shape
    assert bool(jnp.all(jnp.isfinite(y)))
    y_ref = ref_generator_forward(x, params, h)
    tol = 8e-2 * float(jnp.max(jnp.abs(y_ref))) + 1e-6
    err = float(jnp.max(jnp.abs(y.astype(jnp.float32) - y_ref)))
    assert err < tol, (err, tol)

    # Case 2: small odd T -> single full-T tile fallback path.
    B2, T2 = 1, 16
    x2 = jax.random.normal(xkey2, (B2, 80, T2), jnp.float32)
    y2 = jax.block_until_ready(generator_forward(x2, params, h))
    assert y2.shape == (B2, 1, T2 * up_total), y2.shape
    assert bool(jnp.all(jnp.isfinite(y2)))
    y2_ref = ref_generator_forward(x2, params, h)
    tol2 = 8e-2 * float(jnp.max(jnp.abs(y2_ref))) + 1e-6
    err2 = float(jnp.max(jnp.abs(y2.astype(jnp.float32) - y2_ref)))
    assert err2 < tol2, (err2, tol2)

    print("KERNEL_OK")
</pallas_src>

<mosaic_0001>
module attributes {stable_mosaic.version = 11 : i64} {
  func.func @_fused_conv_kernel(%arg0: i32, %arg1: i32, %arg2: memref<1x80x128xf32, #tpu.memory_space<vmem>>, %arg3: memref<1x80x128xf32, #tpu.memory_space<vmem>>, %arg4: memref<1x80x128xf32, #tpu.memory_space<vmem>>, %arg5: memref<7x32x80xbf16, #tpu.memory_space<vmem>>, %arg6: memref<32x1xf32, #tpu.memory_space<vmem>>, %arg7: memref<1x32x128xbf16, #tpu.memory_space<vmem>>) attributes {dimension_semantics = [#tpu.dimension_semantics<parallel>, #tpu.dimension_semantics<parallel>], iteration_bounds = array<i64: 3, 2>, scalar_prefetch = 0 : i64, scratch_operands = 0 : i64, tpu.core_type = #tpu.core_type<tc>, window_params = [{transform_indices = @transform_0, window_bounds = array<i64: 1, 80, 128>}, {transform_indices = @transform_1, window_bounds = array<i64: 1, 80, 128>}, {transform_indices = @transform_2, window_bounds = array<i64: 1, 80, 128>}, {pipeline_mode = #tpu.pipeline_mode<synchronous>, transform_indices = @transform_3, window_bounds = array<i64: 7, 32, 80>}, {pipeline_mode = #tpu.pipeline_mode<synchronous>, transform_indices = @transform_4, window_bounds = array<i64: 32, 1>}, {transform_indices = @transform_5, window_bounds = array<i64: 1, 32, 128>}]} {
    %c0 = arith.constant 0 : index
    %c0_0 = arith.constant 0 : index
    %c0_1 = arith.constant 0 : index
    %0 = vector.load %arg2[%c0, %c0_0, %c0_1] : memref<1x80x128xf32, #tpu.memory_space<vmem>>, vector<1x80x128xf32>
    %1 = vector.shape_cast %0 : vector<1x80x128xf32> to vector<80x128xf32>
    %c0_2 = arith.constant 0 : index
    %c0_3 = arith.constant 0 : index
    %c125 = arith.constant 125 : index
    %2 = vector.load %arg3[%c0_2, %c0_3, %c125] : memref<1x80x128xf32, #tpu.memory_space<vmem>>, vector<1x80x3xf32>
    %3 = vector.shape_cast %2 : vector<1x80x3xf32> to vector<80x3xf32>
    %c0_i32 = arith.constant 0 : i32
    %4 = arith.cmpi sgt, %arg0, %c0_i32 : i32
    %cst = arith.constant 0.000000e+00 : f32
    %5 = vector.broadcast %cst : f32 to vector<80x3xf32>
    %6 = arith.select %4, %3, %5 : vector<80x3xf32>
    %c0_4 = arith.constant 0 : index
    %c0_5 = arith.constant 0 : index
    %c0_6 = arith.constant 0 : index
    %7 = vector.load %arg4[%c0_4, %c0_5, %c0_6] : memref<1x80x128xf32, #tpu.memory_space<vmem>>, vector<1x80x3xf32>
    %8 = vector.shape_cast %7 : vector<1x80x3xf32> to vector<80x3xf32>
    %c2_i32 = arith.constant 2 : i32
    %9 = arith.cmpi slt, %arg0, %c2_i32 : i32
    %cst_7 = arith.constant 0.000000e+00 : f32
    %10 = vector.broadcast %cst_7 : f32 to vector<80x3xf32>
    %11 = arith.select %9, %8, %10 : vector<80x3xf32>
    %12 = tpu.concatenate %6, %1, %11 in 1 : vector<80x3xf32>, vector<80x128xf32>, vector<80x3xf32> -> vector<80x134xf32>
    %13 = arith.truncf %12 : vector<80x134xf32> to vector<80x134xbf16>
    %c0_8 = arith.constant 0 : index
    %c0_9 = arith.constant 0 : index
    %c0_10 = arith.constant 0 : index
    %14 = vector.load %arg5[%c0_8, %c0_9, %c0_10] : memref<7x32x80xbf16, #tpu.memory_space<vmem>>, vector<1x32x80xbf16>
    %15 = vector.shape_cast %14 : vector<1x32x80xbf16> to vector<32x80xbf16>
    %16 = vector.extract_strided_slice %13 {offsets = [0, 0], sizes = [80, 128], strides = [1, 1]} : vector<80x134xbf16> to vector<80x128xbf16>
    %cst_11 = arith.constant dense<0.000000e+00> : vector<32x128xf32>
    %17 = tpu.matmul %15, %16, %cst_11 {dimension_numbers = #tpu.dot_dimension_numbers<[1], [0], [0], [1], [0, 0, 1, 1], [], []>} : vector<32x80xbf16>, vector<80x128xbf16>, vector<32x128xf32> -> vector<32x128xf32>
    %c1 = arith.constant 1 : index
    %c0_12 = arith.constant 0 : index
    %c0_13 = arith.constant 0 : index
    %18 = vector.load %arg5[%c1, %c0_12, %c0_13] : memref<7x32x80xbf16, #tpu.memory_space<vmem>>, vector<1x32x80xbf16>
    %19 = vector.shape_cast %18 : vector<1x32x80xbf16> to vector<32x80xbf16>
    %20 = vector.extract_strided_slice %13 {offsets = [0, 1], sizes = [80, 128], strides = [1, 1]} : vector<80x134xbf16> to vector<80x128xbf16>
    %cst_14 = arith.constant dense<0.000000e+00> : vector<32x128xf32>
    %21 = tpu.matmul %19, %20, %cst_14 {dimension_numbers = #tpu.dot_dimension_numbers<[1], [0], [0], [1], [0, 0, 1, 1], [], []>} : vector<32x80xbf16>, vector<80x128xbf16>, vector<32x128xf32> -> vector<32x128xf32>
    %22 = arith.addf %17, %21 : vector<32x128xf32>
    %c2 = arith.constant 2 : index
    %c0_15 = arith.constant 0 : index
    %c0_16 = arith.constant 0 : index
    %23 = vector.load %arg5[%c2, %c0_15, %c0_16] : memref<7x32x80xbf16, #tpu.memory_space<vmem>>, vector<1x32x80xbf16>
    %24 = vector.shape_cast %23 : vector<1x32x80xbf16> to vector<32x80xbf16>
    %25 = vector.extract_strided_slice %13 {offsets = [0, 2], sizes = [80, 128], strides = [1, 1]} : vector<80x134xbf16> to vector<80x128xbf16>
    %cst_17 = arith.constant dense<0.000000e+00> : vector<32x128xf32>
    %26 = tpu.matmul %24, %25, %cst_17 {dimension_numbers = #tpu.dot_dimension_numbers<[1], [0], [0], [1], [0, 0, 1, 1], [], []>} : vector<32x80xbf16>, vector<80x128xbf16>, vector<32x128xf32> -> vector<32x128xf32>
    %27 = arith.addf %22, %26 : vector<32x128xf32>
    %c3 = arith.constant 3 : index
    %c0_18 = arith.constant 0 : index
    %c0_19 = arith.constant 0 : index
    %28 = vector.load %arg5[%c3, %c0_18, %c0_19] : memref<7x32x80xbf16, #tpu.memory_space<vmem>>, vector<1x32x80xbf16>
    %29 = vector.shape_cast %28 : vector<1x32x80xbf16> to vector<32x80xbf16>
    %30 = vector.extract_strided_slice %13 {offsets = [0, 3], sizes = [80, 128], strides = [1, 1]} : vector<80x134xbf16> to vector<80x128xbf16>
    %cst_20 = arith.constant dense<0.000000e+00> : vector<32x128xf32>
    %31 = tpu.matmul %29, %30, %cst_20 {dimension_numbers = #tpu.dot_dimension_numbers<[1], [0], [0], [1], [0, 0, 1, 1], [], []>} : vector<32x80xbf16>, vector<80x128xbf16>, vector<32x128xf32> -> vector<32x128xf32>
    %32 = arith.addf %27, %31 : vector<32x128xf32>
    %c4 = arith.constant 4 : index
    %c0_21 = arith.constant 0 : index
    %c0_22 = arith.constant 0 : index
    %33 = vector.load %arg5[%c4, %c0_21, %c0_22] : memref<7x32x80xbf16, #tpu.memory_space<vmem>>, vector<1x32x80xbf16>
    %34 = vector.shape_cast %33 : vector<1x32x80xbf16> to vector<32x80xbf16>
    %35 = vector.extract_strided_slice %13 {offsets = [0, 4], sizes = [80, 128], strides = [1, 1]} : vector<80x134xbf16> to vector<80x128xbf16>
    %cst_23 = arith.constant dense<0.000000e+00> : vector<32x128xf32>
    %36 = tpu.matmul %34, %35, %cst_23 {dimension_numbers = #tpu.dot_dimension_numbers<[1], [0], [0], [1], [0, 0, 1, 1], [], []>} : vector<32x80xbf16>, vector<80x128xbf16>, vector<32x128xf32> -> vector<32x128xf32>
    %37 = arith.addf %32, %36 : vector<32x128xf32>
    %c5 = arith.constant 5 : index
    %c0_24 = arith.constant 0 : index
    %c0_25 = arith.constant 0 : index
    %38 = vector.load %arg5[%c5, %c0_24, %c0_25] : memref<7x32x80xbf16, #tpu.memory_space<vmem>>, vector<1x32x80xbf16>
    %39 = vector.shape_cast %38 : vector<1x32x80xbf16> to vector<32x80xbf16>
    %40 = vector.extract_strided_slice %13 {offsets = [0, 5], sizes = [80, 128], strides = [1, 1]} : vector<80x134xbf16> to vector<80x128xbf16>
    %cst_26 = arith.constant dense<0.000000e+00> : vector<32x128xf32>
    %41 = tpu.matmul %39, %40, %cst_26 {dimension_numbers = #tpu.dot_dimension_numbers<[1], [0], [0], [1], [0, 0, 1, 1], [], []>} : vector<32x80xbf16>, vector<80x128xbf16>, vector<32x128xf32> -> vector<32x128xf32>
    %42 = arith.addf %37, %41 : vector<32x128xf32>
    %c6 = arith.constant 6 : index
    %c0_27 = arith.constant 0 : index
    %c0_28 = arith.constant 0 : index
    %43 = vector.load %arg5[%c6, %c0_27, %c0_28] : memref<7x32x80xbf16, #tpu.memory_space<vmem>>, vector<1x32x80xbf16>
    %44 = vector.shape_cast %43 : vector<1x32x80xbf16> to vector<32x80xbf16>
    %45 = vector.extract_strided_slice %13 {offsets = [0, 6], sizes = [80, 128], strides = [1, 1]} : vector<80x134xbf16> to vector<80x128xbf16>
    %cst_29 = arith.constant dense<0.000000e+00> : vector<32x128xf32>
    %46 = tpu.matmul %44, %45, %cst_29 {dimension_numbers = #tpu.dot_dimension_numbers<[1], [0], [0], [1], [0, 0, 1, 1], [], []>} : vector<32x80xbf16>, vector<80x128xbf16>, vector<32x128xf32> -> vector<32x128xf32>
    %47 = arith.addf %42, %46 : vector<32x128xf32>
    %c0_30 = arith.constant 0 : index
    %c0_31 = arith.constant 0 : index
    %48 = vector.load %arg6[%c0_30, %c0_31] : memref<32x1xf32, #tpu.memory_space<vmem>>, vector<32x1xf32>
    %49 = vector.broadcast %48 : vector<32x1xf32> to vector<32x128xf32>
    %50 = arith.addf %47, %49 : vector<32x128xf32>
    %51 = arith.truncf %50 : vector<32x128xf32> to vector<32x128xbf16>
    %c0_32 = arith.constant 0 : index
    %c0_33 = arith.constant 0 : index
    %c0_34 = arith.constant 0 : index
    %52 = vector.load %arg7[%c0_32, %c0_33, %c0_34] : memref<1x32x128xbf16, #tpu.memory_space<vmem>>, vector<1x32x128xbf16>
    %53 = vector.shape_cast %52 : vector<1x32x128xbf16> to vector<32x128xbf16>
    %54 = vector.shape_cast %51 : vector<32x128xbf16> to vector<1x32x128xbf16>
    tpu.vector_store %arg7[%c0_32, %c0_33, %c0_34], %54 {strides = array<i32>} : memref<1x32x128xbf16, #tpu.memory_space<vmem>>, vector<1x32x128xbf16>,
    return
  }
  func.func @transform_0(%arg0: i32, %arg1: i32) -> (i32, i32, i32) {
    %c0_i32 = arith.constant 0 : i32
    %c0_i32_0 = arith.constant 0 : i32
    return %arg1, %c0_i32, %arg0 : i32, i32, i32
  }
  func.func @transform_1(%arg0: i32, %arg1: i32) -> (i32, i32, i32) {
    %c1_i32 = arith.constant 1 : i32
    %0 = arith.muli %arg0, %c1_i32 : i32
    %c1_i32_0 = arith.constant 1 : i32
    %1 = arith.subi %0, %c1_i32_0 : i32
    %c0_i32 = arith.constant 0 : i32
    %2 = arith.maxsi %1, %c0_i32 : i32
    %c0_i32_1 = arith.constant 0 : i32
    %c0_i32_2 = arith.constant 0 : i32
    return %arg1, %c0_i32_1, %2 : i32, i32, i32
  }
  func.func @transform_2(%arg0: i32, %arg1: i32) -> (i32, i32, i32) {
    %c1_i32 = arith.constant 1 : i32
    %0 = arith.addi %arg0, %c1_i32 : i32
    %c1_i32_0 = arith.constant 1 : i32
    %1 = arith.muli %0, %c1_i32_0 : i32
    %c2_i32 = arith.constant 2 : i32
    %2 = arith.minsi %1, %c2_i32 : i32
    %c0_i32 = arith.constant 0 : i32
    %c0_i32_1 = arith.constant 0 : i32
    return %arg1, %c0_i32, %2 : i32, i32, i32
  }
  func.func @transform_3(%arg0: i32, %arg1: i32) -> (i32, i32, i32) {
    %c0_i32 = arith.constant 0 : i32
    %c0_i32_0 = arith.constant 0 : i32
    %c0_i32_1 = arith.constant 0 : i32
    %c0_i32_2 = arith.constant 0 : i32
    return %c0_i32, %c0_i32_0, %c0_i32_1 : i32, i32, i32
  }
  func.func @transform_4(%arg0: i32, %arg1: i32) -> (i32, i32) {
    %c0_i32 = arith.constant 0 : i32
    %c0_i32_0 = arith.constant 0 : i32
    %c0_i32_1 = arith.constant 0 : i32
    return %c0_i32, %c0_i32_0 : i32, i32
  }
  func.func @transform_5(%arg0: i32, %arg1: i32) -> (i32, i32, i32) {
    %c0_i32 = arith.constant 0 : i32
    %c0_i32_0 = arith.constant 0 : i32
    return %arg1, %c0_i32, %arg0 : i32, i32, i32
  }
}

</mosaic_0001>

<llo_original>
// kernel: tpu_custom_call.1
$region0: #{tpu_custom_call.1}
  #allocation0 [shape = 'u32[]', space=smem, size = 0x4, offset = 0x4, fixed_abs, tag = 'smem constant byte address 0x4 - core index']
  #allocation1 [shape = 'u32[144,128]{1,0:T(1,128)}', space=vmem, size = 0x12000, scoped, tag = 'internal scratch']
  %s0 = inlined_call_operand.hbm [shape: f32[2,80,384], index: 0, kind: input, shape index: {}]
  %s1 = inlined_call_operand.hbm [shape: f32[2,80,384], index: 1, kind: input, shape index: {}]
  %s2 = inlined_call_operand.hbm [shape: f32[2,80,384], index: 2, kind: input, shape index: {}]
  %s3 = inlined_call_operand.hbm [shape: bf16[7,32,80], index: 3, kind: input, shape index: {}]
  %s4 = inlined_call_operand.vmem [shape: f32[32,1], index: 4, kind: input, shape index: {}]
  %s5 = inlined_call_operand.hbm [shape: bf16[2,32,384], index: 5, kind: output, shape index: {}]
  %s6 = sld [smem:[#allocation0]]
  $region69: #{tpu_custom_call.1} parent=0
    _
  %s8 = ssub.s32 1, %s6
  %s9 = scalar_select 0, %s8, %s6
  $region1: #{tpu_custom_call.1} parent=0
    #allocation2 [shape = 'u8[81920]{0}', space=vmem, size = 0x14000, scoped, tag = 'input window, operand 0']
    #allocation3 [shape = 's32[2]{0}', space=sflag, size = 0x8, scoped, tag = 'scoped memory for tpu_custom_call.1']
    #allocation4 [shape = 's32[2]{0}', space=sflag, size = 0x8, scoped, tag = 'scoped memory for tpu_custom_call.1']
    #allocation5 [shape = 'u8[81920]{0}', space=vmem, size = 0x14000, scoped, tag = 'input window, operand 1']
    #allocation6 [shape = 's32[2]{0}', space=sflag, size = 0x8, scoped, tag = 'scoped memory for tpu_custom_call.1']
    #allocation7 [shape = 'u8[81920]{0}', space=vmem, size = 0x14000, scoped, tag = 'input window, operand 2']
    #allocation8 [shape = 'u8[57344]{0}', space=vmem, size = 0xe000, scoped, tag = 'input window, operand 3, single buffered']
    #allocation9 [shape = 's32[1]{0}', space=sflag, size = 0x4, scoped, tag = 'scoped memory for tpu_custom_call.1']
    #allocation10 [shape = 'u8[16384]{0}', space=vmem, size = 0x4000, scoped, tag = 'output window, operand 0']
    %10 = vsyncpa [#allocation3], 0
    %s11 = scalar_lea.sflag [#allocation3], 1
    %12 = vsyncpa %s11, 0
    %13 = vsyncpa [#allocation6], 0
    %s14 = scalar_lea.sflag [#allocation6], 1
    %15 = vsyncpa %s14, 0
    %16 = vsyncpa [#allocation9], 0
    %17 = vsyncpa [#allocation4], 0
    %s18 = scalar_lea.sflag [#allocation4], 1
    %19 = vsyncpa %s18, 0
    loop: start=0, step=1, limit=8
    $region2: #{tpu_custom_call.1} parent=1 // loop_pre_header
      _
    $region3: #{tpu_custom_call.1} parent=1 // loop_header
      %s21 = sphi 0, %s25
      %p22 = scmp.ge.s32.totalorder %s21, 8
      %s28 = sphi 0, %s40
      %s29 = sphi 0, %s36
      %s30 = sphi 0, %s28
      %s31 = sphi 0, %s29
      %s32 = sphi 0, %s30
      %s33 = sphi 0, %s31
      %s45 = sphi 0, %s47
      %s48 = sphi 0, %s45
      %s49 = sphi 0, %s48
      %s65 = sphi 0, %s49
      %s79 = sphi 0, %s81
      %s82 = sphi 0, %s79
      %s83 = sphi 0, %s82
      %s99 = sphi 0, %s83
      %s113 = sphi 0, %s115
      %s116 = sphi 0, %s113
      %s117 = sphi 0, %s116
      %s133 = sphi 0, %s117
      %s137 = sphi 0, %s137
      %s139 = sphi 0, %s137
      %s140 = sphi 0, %s139
      %s154 = sphi 0, %s140
      %s158 = sphi 0, %s158
      %s160 = sphi 0, %s158
      %s161 = sphi 0, %s160
      %s175 = sphi 0, %s161
      %s183 = sphi 0, %s185
      %s186 = sphi 0, %s183
      %s187 = sphi 0, %s186
      %s203 = sphi 0, %s187
    $region4: #{tpu_custom_call.1} parent=1 // loop_header_branch
      %24 = sbr.rel (%p22) target = $region8
    $region5: #{tpu_custom_call.1} parent=1 // loop_body
      %s26 = ssub.s32 %s21, 1
      %s27 = ssub.s32 %s21, 2
      %s34 = sadd.s32 1, %s29
      %p35 = scmp.ge.s32.totalorder %s34, 2
      %s36 = scalar_select %p35, 0, %s34
      %s37 = sadd.s32 1, %s28
      %s38 = scalar_select %p35, %s37, %s28
      %p39 = scmp.ge.s32.totalorder %s38, 3
      %s40 = scalar_select %p39, 0, %s38
      %s41 = ssub.s32 %s29, %s36
      %s42 = ssub.s32 %s28, %s40
      %s43 = sor.u32 %s41, %s42
      %p44 = scmp.eq.s32.totalorder %s43, 0
      %s46 = sadd.s32 %s45, 1
      %s47 = scalar_select %p44, %s45, %s46
      %p50 = pneg %p44
      %p51 = scmp.eq.s32.totalorder %s21, 5
      %p52 = por %p50, %p51
      %p53 = scmp.ne.s32.totalorder %s45, %s48
      %p54 = scmp.eq.s32.totalorder %s21, 0
      %p55 = por %p53, %p54
      %p56 = scmp.ne.s32.totalorder %s45, %s48
      %p57 = scmp.eq.s32.totalorder %s26, 5
      %p58 = por %p56, %p57
      %p59 = scmp.ne.s32.totalorder %s48, %s49
      %p60 = scmp.eq.s32.totalorder %s26, 0
      %p61 = por %p59, %p60
      %p62 = scmp.ne.s32.totalorder %s48, %s49
      %p63 = scmp.eq.s32.totalorder %s27, 5
      %p64 = por %p62, %p63
      %p66 = scmp.ne.s32.totalorder %s49, %s65
      %p67 = scmp.eq.s32.totalorder %s27, 0
      %p68 = por %p66, %p67
      %s69 = ssub.s32 %s28, 1
      %p70 = scmp.gt.s32.totalorder %s69, 0
      %s71 = scalar_select %p70, %s69, 0
      %s72 = ssub.s32 %s40, 1
      %p73 = scmp.gt.s32.totalorder %s72, 0
      %s74 = scalar_select %p73, %s72, 0
      %s75 = ssub.s32 %s29, %s36
      %s76 = ssub.s32 %s71, %s74
      %s77 = sor.u32 %s75, %s76
      %p78 = scmp.eq.s32.totalorder %s77, 0
      %s80 = sadd.s32 %s79, 1
      %s81 = scalar_select %p78, %s79, %s80
      %p84 = pneg %p78
      %p85 = scmp.eq.s32.totalorder %s21, 5
      %p86 = por %p84, %p85
      %p87 = scmp.ne.s32.totalorder %s79, %s82
      %p88 = scmp.eq.s32.totalorder %s21, 0
      %p89 = por %p87, %p88
      %p90 = scmp.ne.s32.totalorder %s79, %s82
      %p91 = scmp.eq.s32.totalorder %s26, 5
      %p92 = por %p90, %p91
      %p93 = scmp.ne.s32.totalorder %s82, %s83
      %p94 = scmp.eq.s32.totalorder %s26, 0
      %p95 = por %p93, %p94
      %p96 = scmp.ne.s32.totalorder %s82, %s83
      %p97 = scmp.eq.s32.totalorder %s27, 5
      %p98 = por %p96, %p97
      %p100 = scmp.ne.s32.totalorder %s83, %s99
      %p101 = scmp.eq.s32.totalorder %s27, 0
      %p102 = por %p100, %p101
      %s103 = sadd.s32 %s28, 1
      %p104 = scmp.lt.s32.totalorder %s103, 2
      %s105 = scalar_select %p104, %s103, 2
      %s106 = sadd.s32 %s40, 1
      %p107 = scmp.lt.s32.totalorder %s106, 2
      %s108 = scalar_select %p107, %s106, 2
      %s109 = ssub.s32 %s29, %s36
      %s110 = ssub.s32 %s105, %s108
      %s111 = sor.u32 %s109, %s110
      %p112 = scmp.eq.s32.totalorder %s111, 0
      %s114 = sadd.s32 %s113, 1
      %s115 = scalar_select %p112, %s113, %s114
      %p118 = pneg %p112
      %p119 = scmp.eq.s32.totalorder %s21, 5
      %p120 = por %p118, %p119
      %p121 = scmp.ne.s32.totalorder %s113, %s116
      %p122 = scmp.eq.s32.totalorder %s21, 0
      %p123 = por %p121, %p122
      %p124 = scmp.ne.s32.totalorder %s113, %s116
      %p125 = scmp.eq.s32.totalorder %s26, 5
      %p126 = por %p124, %p125
      %p127 = scmp.ne.s32.totalorder %s116, %s117
      %p128 = scmp.eq.s32.totalorder %s26, 0
      %p129 = por %p127, %p128
      %p130 = scmp.ne.s32.totalorder %s116, %s117
      %p131 = scmp.eq.s32.totalorder %s27, 5
      %p132 = por %p130, %p131
      %p134 = scmp.ne.s32.totalorder %s117, %s133
      %p135 = scmp.eq.s32.totalorder %s27, 0
      %p136 = por %p134, %p135
      %s138 = sadd.s32 %s137, 1
      %p141 = scmp.eq.s32.totalorder %s21, 5
      %p142 = scmp.ne.s32.totalorder %s137, %s139
      %p143 = scmp.eq.s32.totalorder %s21, 0
      %p144 = por %p142, %p143
      %p145 = scmp.ne.s32.totalorder %s137, %s139
      %p146 = scmp.eq.s32.totalorder %s26, 5
      %p147 = por %p145, %p146
      %p148 = scmp.ne.s32.totalorder %s139, %s140
      %p149 = scmp.eq.s32.totalorder %s26, 0
      %p150 = por %p148, %p149
      %p151 = scmp.ne.s32.totalorder %s139, %s140
      %p152 = scmp.eq.s32.totalorder %s27, 5
      %p153 = por %p151, %p152
      %p155 = scmp.ne.s32.totalorder %s140, %s154
      %p156 = scmp.eq.s32.totalorder %s27, 0
      %p157 = por %p155, %p156
      %s159 = sadd.s32 %s158, 1
      %p162 = scmp.eq.s32.totalorder %s21, 5
      %p163 = scmp.ne.s32.totalorder %s158, %s160
      %p164 = scmp.eq.s32.totalorder %s21, 0
      %p165 = por %p163, %p164
      %p166 = scmp.ne.s32.totalorder %s158, %s160
      %p167 = scmp.eq.s32.totalorder %s26, 5
      %p168 = por %p166, %p167
      %p169 = scmp.ne.s32.totalorder %s160, %s161
      %p170 = scmp.eq.s32.totalorder %s26, 0
      %p171 = por %p169, %p170
      %p172 = scmp.ne.s32.totalorder %s160, %s161
      %p173 = scmp.eq.s32.totalorder %s27, 5
      %p174 = por %p172, %p173
      %p176 = scmp.ne.s32.totalorder %s161, %s175
      %p177 = scmp.eq.s32.totalorder %s27, 0
      %p178 = por %p176, %p177
      %s179 = ssub.s32 %s29, %s36
      %s180 = ssub.s32 %s28, %s40
      %s181 = sor.u32 %s179, %s180
      %p182 = scmp.eq.s32.totalorder %s181, 0
      %s184 = sadd.s32 %s183, 1
      %s185 = scalar_select %p182, %s183, %s184
      %p188 = pneg %p182
      %p189 = scmp.eq.s32.totalorder %s21, 5
      %p190 = por %p188, %p189
      %p191 = scmp.ne.s32.totalorder %s183, %s186
      %p192 = scmp.eq.s32.totalorder %s21, 0
      %p193 = por %p191, %p192
      %p194 = scmp.ne.s32.totalorder %s183, %s186
      %p195 = scmp.eq.s32.totalorder %s26, 5
      %p196 = por %p194, %p195
      %p197 = scmp.ne.s32.totalorder %s186, %s187
      %p198 = scmp.eq.s32.totalorder %s26, 0
      %p199 = por %p197, %p198
      %p200 = scmp.ne.s32.totalorder %s186, %s187
      %p201 = scmp.eq.s32.totalorder %s27, 5
      %p202 = por %p200, %p201
      %p204 = scmp.ne.s32.totalorder %s187, %s203
      %p205 = scmp.eq.s32.totalorder %s27, 0
      %p206 = por %p204, %p205
      %p207 = scmp.le.s32.totalorder 1, %s21
      %p208 = scmp.lt.s32.totalorder %s21, 7
      %p209 = pnand %p207, %p208
      %p210 = pneg %p209
      // Predicated region
      $region9: #{tpu_custom_call.1} parent=5 // pred_check
        _
      $region10: #{tpu_custom_call.1} parent=5 // pred_check_branch
        %212 = sbr.rel (%p209) target = $region12
      $region11: #{tpu_custom_call.1} parent=5 // pred_region
        %s213 = ssub.s32 %s21, 1
        // Predicated region
        $region13: #{tpu_custom_call.1} parent=11 // pred_check
          %p214 = pneg %p150
        $region14: #{tpu_custom_call.1} parent=11 // pred_check_branch
          %216 = sbr.rel (%p214) target = $region16
        $region15: #{tpu_custom_call.1} parent=11 // pred_region
          %s218 = ssub.s32 1792, 1792
          %219 = vsyncadd [#allocation9], %s218
          %s220 = sshll.u32 [#allocation8], 4
          %s221 = int_to_ptr.vmem [resolvable:$true] %s220
          %226 = dma.hbm_to_vmem [thread:$0]  %s3, 1792, %s221, [#allocation9], 64, 64, 4
        $region16: #{tpu_custom_call.1} parent=11 // pred_fallthru
          _
        // Predicated region
        $region17: #{tpu_custom_call.1} parent=11 // pred_check
          %p227 = pneg %p171
        $region18: #{tpu_custom_call.1} parent=11 // pred_check_branch
          %229 = sbr.rel (%p227) target = $region20
        $region19: #{tpu_custom_call.1} parent=11 // pred_region
          _
        $region20: #{tpu_custom_call.1} parent=11 // pred_fallthru
          _
      $region12: #{tpu_custom_call.1} parent=5 // pred_fallthru
        _
      %p230 = scmp.lt.s32.totalorder %s21, 6
      // Predicated region
      $region21: #{tpu_custom_call.1} parent=5 // pred_check
        %p231 = pneg %p230
      $region22: #{tpu_custom_call.1} parent=5 // pred_check_branch
        %233 = sbr.rel (%p231) target = $region24
      $region23: #{tpu_custom_call.1} parent=5 // pred_region
        // Predicated region
        $region25: #{tpu_custom_call.1} parent=23 // pred_check
          %p234 = pneg %p55
        $region26: #{tpu_custom_call.1} parent=23 // pred_check_branch
          %236 = sbr.rel (%p234) target = $region28
        $region27: #{tpu_custom_call.1} parent=23 // pred_region
          %s237 = sand.u32 %s45, 1
          %s238 = scalar_lea.sflag [#allocation3], %s237
          %s239 = sand.u32 %s45, 1
          %s240 = smul.addr %s239, 80
          %s241 = scalar_lea.vmem [#allocation2], %s240
          %s243 = ssub.s32 1280, 1280
          %244 = vsyncadd %s238, %s243
          %s245 = smul.addr %s29, 30
          %s246 = sadd.s32 %s28, %s245
          %s247 = smul.addr %s246, 128
          %s248 = scalar_lea.hbm %s0, %s247
          %s249 = sshll.u32 %s241, 4
          %s250 = int_to_ptr.vmem [resolvable:$true] %s249
          %255 = dma.hbm_to_vmem [thread:$0]  %s248, 1280, %s250, %s238, 384, 128, 8
        $region28: #{tpu_custom_call.1} parent=23 // pred_fallthru
          _
        // Predicated region
        $region29: #{tpu_custom_call.1} parent=23 // pred_check
          %p256 = pneg %p89
        $region30: #{tpu_custom_call.1} parent=23 // pred_check_branch
          %258 = sbr.rel (%p256) target = $region32
        $region31: #{tpu_custom_call.1} parent=23 // pred_region
          %s259 = sand.u32 %s21, 1
          %s260 = scalar_lea.sflag [#allocation6], %s259
          %s261 = sand.u32 %s79, 1
          %s262 = smul.addr %s261, 80
          %s263 = scalar_lea.vmem [#allocation5], %s262
          %s264 = ssub.s32 %s28, 1
          %p265 = scmp.gt.s32.totalorder %s264, 0
          %s266 = scalar_select %p265, %s264, 0
          %s268 = ssub.s32 1280, 1280
          %269 = vsyncadd %s260, %s268
          %s270 = smul.addr %s29, 30
          %s271 = sadd.s32 %s266, %s270
          %s272 = smul.addr %s271, 128
          %s273 = scalar_lea.hbm %s1, %s272
          %s274 = sshll.u32 %s263, 4
          %s275 = int_to_ptr.vmem [resolvable:$true] %s274
          %280 = dma.hbm_to_vmem [thread:$0]  %s273, 1280, %s275, %s260, 384, 128, 8
        $region32: #{tpu_custom_call.1} parent=23 // pred_fallthru
          _
        // Predicated region
        $region33: #{tpu_custom_call.1} parent=23 // pred_check
          %p281 = pneg %p123
        $region34: #{tpu_custom_call.1} parent=23 // pred_check_branch
          %283 = sbr.rel (%p281) target = $region36
        $region35: #{tpu_custom_call.1} parent=23 // pred_region
          %s284 = sand.u32 %s21, 1
          %s285 = scalar_lea.sflag [#allocation6], %s284
          %s286 = sand.u32 %s113, 1
          %s287 = smul.addr %s286, 80
          %s288 = scalar_lea.vmem [#allocation7], %s287
          %s289 = sadd.s32 %s28, 1
          %p290 = scmp.lt.s32.totalorder %s289, 2
          %s291 = scalar_select %p290, %s289, 2
          %s293 = ssub.s32 1280, 1280
          %294 = vsyncadd %s285, %s293
          %s295 = smul.addr %s29, 30
          %s296 = sadd.s32 %s291, %s295
          %s297 = smul.addr %s296, 128
          %s298 = scalar_lea.hbm %s2, %s297
          %s299 = sshll.u32 %s288, 4
          %s300 = int_to_ptr.vmem [resolvable:$true] %s299
          %305 = dma.hbm_to_vmem [thread:$0]  %s298, 1280, %s300, %s285, 384, 128, 8
        $region36: #{tpu_custom_call.1} parent=23 // pred_fallthru
          _
      $region24: #{tpu_custom_call.1} parent=5 // pred_fallthru
        _
      %p306 = scmp.le.s32.totalorder 1, %s21
      %p307 = scmp.lt.s32.totalorder %s21, 7
      %p308 = pnand %p306, %p307
      %p309 = pneg %p308
      // Predicated region
      $region37: #{tpu_custom_call.1} parent=5 // pred_check
        _
      $region38: #{tpu_custom_call.1} parent=5 // pred_check_branch
        %311 = sbr.rel (%p308) target = $region40
      $region39: #{tpu_custom_call.1} parent=5 // pred_region
        %s312 = ssub.s32 %s21, 1
        %s313 = sand.u32 %s48, 1
        %s314 = scalar_lea.sflag [#allocation3], %s313
        %s315 = sand.u32 %s48, 1
        %s316 = smul.addr %s315, 80
        %s317 = scalar_lea.vmem [#allocation2], %s316
        // Predicated region
        $region41: #{tpu_custom_call.1} parent=39 // pred_check
          %p318 = pneg %p61
        $region42: #{tpu_custom_call.1} parent=39 // pred_check_branch
          %320 = sbr.rel (%p318) target = $region44
        $region43: #{tpu_custom_call.1} parent=39 // pred_region
          %321 = dma.done %s314, 1280
        $region44: #{tpu_custom_call.1} parent=39 // pred_fallthru
          _
        %s322 = sand.u32 %s26, 1
        %s323 = scalar_lea.sflag [#allocation6], %s322
        %s324 = sand.u32 %s82, 1
        %s325 = smul.addr %s324, 80
        %s326 = scalar_lea.vmem [#allocation5], %s325
        // Predicated region
        $region45: #{tpu_custom_call.1} parent=39 // pred_check
          %p327 = pneg %p95
        $region46: #{tpu_custom_call.1} parent=39 // pred_check_branch
          %329 = sbr.rel (%p327) target = $region48
        $region47: #{tpu_custom_call.1} parent=39 // pred_region
          %330 = dma.done %s323, 1280
        $region48: #{tpu_custom_call.1} parent=39 // pred_fallthru
          _
        %s331 = sand.u32 %s26, 1
        %s332 = scalar_lea.sflag [#allocation6], %s331
        %s333 = sand.u32 %s116, 1
        %s334 = smul.addr %s333, 80
        %s335 = scalar_lea.vmem [#allocation7], %s334
        // Predicated region
        $region49: #{tpu_custom_call.1} parent=39 // pred_check
          %p336 = pneg %p129
        $region50: #{tpu_custom_call.1} parent=39 // pred_check_branch
          %338 = sbr.rel (%p336) target = $region52
        $region51: #{tpu_custom_call.1} parent=39 // pred_region
          %339 = dma.done %s332, 1280
        $region52: #{tpu_custom_call.1} parent=39 // pred_fallthru
          _
        // Predicated region
        $region53: #{tpu_custom_call.1} parent=39 // pred_check
          %p340 = pneg %p150
        $region54: #{tpu_custom_call.1} parent=39 // pred_check_branch
          %342 = sbr.rel (%p340) target = $region56
        $region55: #{tpu_custom_call.1} parent=39 // pred_region
          %343 = dma.done [#allocation9], 1792
        $region56: #{tpu_custom_call.1} parent=39 // pred_fallthru
          _
        %s344 = sand.u32 %s48, 1
        %s345 = scalar_lea.sflag [#allocation3], %s344
        %s346 = sand.u32 %s48, 1
        %s347 = smul.addr %s346, 80
        %s348 = scalar_lea.vmem [#allocation2], %s347
        %p349 = pneg %p61
        %p350 = pneg %p58
        %s351 = sand.u32 %s26, 1
        %s352 = scalar_lea.sflag [#allocation6], %s351
        %s353 = sand.u32 %s82, 1
        %s354 = smul.addr %s353, 80
        %s355 = scalar_lea.vmem [#allocation5], %s354
        %p356 = pneg %p95
        %p357 = pneg %p92
        %s358 = sand.u32 %s26, 1
        %s359 = scalar_lea.sflag [#allocation6], %s358
        %s360 = sand.u32 %s116, 1
        %s361 = smul.addr %s360, 80
        %s362 = scalar_lea.vmem [#allocation7], %s361
        %p363 = pneg %p129
        %p364 = pneg %p126
        %p365 = pneg %p150
        %p366 = pneg %p147
        %p367 = pneg %p171
        %p368 = pneg %p168
        %p369 = pneg %p199
        %p370 = pneg %p196
        %s371 = sand.u32 %s186, 1
        %s372 = scalar_lea.sflag [#allocation4], %s371
        %s373 = sand.u32 %s186, 1
        %s374 = smul.addr %s373, 16
        %s375 = scalar_lea.vmem [#allocation10], %s374
        %s376 = ssub.s32 %s30, 1
        %p377 = scmp.gt.s32.totalorder %s376, 0
        %s378 = scalar_select %p377, %s376, 0
        %s379 = sadd.s32 %s30, 1
        %p380 = scmp.lt.s32.totalorder %s379, 2
        %s381 = scalar_select %p380, %s379, 2
        %v383 = vld [vmem:[%s317] sm:$0xff]
        %v384 = vld [vmem:[%s317 + $0x8] sm:$0xff]
        %v385 = vld [vmem:[%s317 + $0x10] sm:$0xff]
        %v386 = vld [vmem:[%s317 + $0x18] sm:$0xff]
        %v387 = vld [vmem:[%s317 + $0x20] sm:$0xff]
        %v388 = vld [vmem:[%s317 + $0x28] sm:$0xff]
        %v389 = vld [vmem:[%s317 + $0x30] sm:$0xff]
        %v390 = vld [vmem:[%s317 + $0x38] sm:$0xff]
        %v391 = vld [vmem:[%s317 + $0x40] sm:$0xff]
        %v392 = vld [vmem:[%s317 + $0x48] sm:$0xff]
        %v393 = vld [vmem:[%s326] sm:$0xff]
        %v394 = vld [vmem:[%s326 + $0x8] sm:$0xff]
        %v395 = vld [vmem:[%s326 + $0x10] sm:$0xff]
        %v396 = vld [vmem:[%s326 + $0x18] sm:$0xff]
        %v397 = vld [vmem:[%s326 + $0x20] sm:$0xff]
        %v398 = vld [vmem:[%s326 + $0x28] sm:$0xff]
        %v399 = vld [vmem:[%s326 + $0x30] sm:$0xff]
        %v400 = vld [vmem:[%s326 + $0x38] sm:$0xff]
        %v401 = vld [vmem:[%s326 + $0x40] sm:$0xff]
        %v402 = vld [vmem:[%s326 + $0x48] sm:$0xff]
        %p403 = scmp.gt.s32.totalorder %s30, 0
        %s404 = scalar_select %p403, 1, 0
        %v405 = vstv %s404
        %vm406 = vcmp.eq.s32.totalorder %v405, 1
        %v407 = vsel %vm406, %v393, 0.0
        %v408 = vsel %vm406, %v394, 0.0
        %v409 = vsel %vm406, %v395, 0.0
        %v410 = vsel %vm406, %v396, 0.0
        %v411 = vsel %vm406, %v397, 0.0
        %v412 = vsel %vm406, %v398, 0.0
        %v413 = vsel %vm406, %v399, 0.0
        %v414 = vsel %vm406, %v400, 0.0
        %v415 = vsel %vm406, %v401, 0.0
        %v416 = vsel %vm406, %v402, 0.0
        %v417 = vld [vmem:[%s335] sm:$0xff]
        %v418 = vld [vmem:[%s335 + $0x8] sm:$0xff]
        %v419 = vld [vmem:[%s335 + $0x10] sm:$0xff]
        %v420 = vld [vmem:[%s335 + $0x18] sm:$0xff]
        %v421 = vld [vmem:[%s335 + $0x20] sm:$0xff]
        %v422 = vld [vmem:[%s335 + $0x28] sm:$0xff]
        %v423 = vld [vmem:[%s335 + $0x30] sm:$0xff]
        %v424 = vld [vmem:[%s335 + $0x38] sm:$0xff]
        %v425 = vld [vmem:[%s335 + $0x40] sm:$0xff]
        %v426 = vld [vmem:[%s335 + $0x48] sm:$0xff]
        %p427 = scmp.lt.s32.totalorder %s30, 2
        %s428 = scalar_select %p427, 1, 0
        %v429 = vstv %s428
        %vm430 = vcmp.eq.s32.totalorder %v429, 1
        %v431 = vsel %vm430, %v417, 0.0
        %v432 = vsel %vm430, %v418, 0.0
        %v433 = vsel %vm430, %v419, 0.0
        %v434 = vsel %vm430, %v420, 0.0
        %v435 = vsel %vm430, %v421, 0.0
        %v436 = vsel %vm430, %v422, 0.0
        %v437 = vsel %vm430, %v423, 0.0
        %v438 = vsel %vm430, %v424, 0.0
        %v439 = vsel %vm430, %v425, 0.0
        %v440 = vsel %vm430, %v426, 0.0
        %451 = vrot.lane.b32.xlu0 %v407, 3
        %v452 = vpop.permute.xlu0 %451
        %453 = vrot.lane.b32.xlu0 %v408, 3
        %v454 = vpop.permute.xlu0 %453
        %455 = vrot.lane.b32.xlu0 %v409, 3
        %v456 = vpop.permute.xlu0 %455
        %457 = vrot.lane.b32.xlu0 %v410, 3
        %v458 = vpop.permute.xlu0 %457
        %459 = vrot.lane.b32.xlu0 %v411, 3
        %v460 = vpop.permute.xlu0 %459
        %461 = vrot.lane.b32.xlu0 %v412, 3
        %v462 = vpop.permute.xlu0 %461
        %463 = vrot.lane.b32.xlu0 %v413, 3
        %v464 = vpop.permute.xlu0 %463
        %465 = vrot.lane.b32.xlu0 %v414, 3
        %v466 = vpop.permute.xlu0 %465
        %467 = vrot.lane.b32.xlu0 %v415, 3
        %v468 = vpop.permute.xlu0 %467
        %469 = vrot.lane.b32.xlu0 %v416, 3
        %v470 = vpop.permute.xlu0 %469
        %491 = vrot.lane.b32.xlu0 %v383, 3
        %v492 = vpop.permute.xlu0 %491
        %493 = vrot.lane.b32.xlu0 %v384, 3
        %v494 = vpop.permute.xlu0 %493
        %495 = vrot.lane.b32.xlu0 %v385, 3
        %v496 = vpop.permute.xlu0 %495
        %497 = vrot.lane.b32.xlu0 %v386, 3
        %v498 = vpop.permute.xlu0 %497
        %499 = vrot.lane.b32.xlu0 %v387, 3
        %v500 = vpop.permute.xlu0 %499
        %501 = vrot.lane.b32.xlu0 %v388, 3
        %v502 = vpop.permute.xlu0 %501
        %503 = vrot.lane.b32.xlu0 %v389, 3
        %v504 = vpop.permute.xlu0 %503
        %505 = vrot.lane.b32.xlu0 %v390, 3
        %v506 = vpop.permute.xlu0 %505
        %507 = vrot.lane.b32.xlu0 %v391, 3
        %v508 = vpop.permute.xlu0 %507
        %509 = vrot.lane.b32.xlu0 %v392, 3
        %v510 = vpop.permute.xlu0 %509
        %531 = vrot.lane.b32.xlu0 %v431, 3
        %v532 = vpop.permute.xlu0 %531
        %533 = vrot.lane.b32.xlu0 %v432, 3
        %v534 = vpop.permute.xlu0 %533
        %535 = vrot.lane.b32.xlu0 %v433, 3
        %v536 = vpop.permute.xlu0 %535
        %537 = vrot.lane.b32.xlu0 %v434, 3
        %v538 = vpop.permute.xlu0 %537
        %539 = vrot.lane.b32.xlu0 %v435, 3
        %v540 = vpop.permute.xlu0 %539
        %541 = vrot.lane.b32.xlu0 %v436, 3
        %v542 = vpop.permute.xlu0 %541
        %543 = vrot.lane.b32.xlu0 %v437, 3
        %v544 = vpop.permute.xlu0 %543
        %545 = vrot.lane.b32.xlu0 %v438, 3
        %v546 = vpop.permute.xlu0 %545
        %547 = vrot.lane.b32.xlu0 %v439, 3
        %v548 = vpop.permute.xlu0 %547
        %549 = vrot.lane.b32.xlu0 %v440, 3
        %v550 = vpop.permute.xlu0 %549
        %vm561 = vcmask 23552
        %v562 = vsel %vm561, %v452, %v492
        %v563 = vsel %vm561, %v454, %v494
        %v564 = vsel %vm561, %v456, %v496
        %v565 = vsel %vm561, %v458, %v498
        %v566 = vsel %vm561, %v460, %v500
        %v567 = vsel %vm561, %v462, %v502
        %v568 = vsel %vm561, %v464, %v504
        %v569 = vsel %vm561, %v466, %v506
        %v570 = vsel %vm561, %v468, %v508
        %v571 = vsel %vm561, %v470, %v510
        %v572 = vsel %vm561, %v492, %v532
        %v573 = vsel %vm561, %v494, %v534
        %v574 = vsel %vm561, %v496, %v536
        %v575 = vsel %vm561, %v498, %v538
        %v576 = vsel %vm561, %v500, %v540
        %v577 = vsel %vm561, %v502, %v542
        %v578 = vsel %vm561, %v504, %v544
        %v579 = vsel %vm561, %v506, %v546
        %v580 = vsel %vm561, %v508, %v548
        %v581 = vsel %vm561, %v510, %v550
        %v582 = vpack.c.bf16 %v563, %v562
        %v583 = vpack.c.bf16 %v573, %v572
        %v584 = vpack.c.bf16 %v565, %v564
        %v585 = vpack.c.bf16 %v575, %v574
        %v586 = vpack.c.bf16 %v567, %v566
        %v587 = vpack.c.bf16 %v577, %v576
        %v588 = vpack.c.bf16 %v569, %v568
        %v589 = vpack.c.bf16 %v579, %v578
        %v590 = vpack.c.bf16 %v571, %v570
        %v591 = vpack.c.bf16 %v581, %v580
        %v592 = vld [vmem:[#allocation8] sm:$0xf]
        %v593 = vld [vmem:[#allocation8 + $0x4] sm:$0xf]
        %v594 = vld [vmem:[#allocation8 + $0x8] sm:$0xf]
        %v595 = vld [vmem:[#allocation8 + $0xc] sm:$0xf]
        %s596 = scalar_lea.vmem [#allocation8], 16
        %v597 = vld [vmem:[%s596] sm:$0xf]
        %v598 = vld [vmem:[%s596 + $0x4] sm:$0xf]
        %v599 = vld [vmem:[%s596 + $0x8] sm:$0xf]
        %v600 = vld [vmem:[%s596 + $0xc] sm:$0xf]
        %v605 = vunpack.c.l.b16 %v597
        %v606 = vunpack.c.l.b16 %v598
        %v607 = vunpack.c.l.b16 %v599
        %v608 = vunpack.c.l.b16 %v600
        %v609 = vpack.c.b16 %v606, %v605
        %v610 = vpack.c.b16 %v608, %v607
        %621 = vrot.lane.b32.xlu0 %v582, 127
        %v622 = vpop.permute.xlu0 %621
        %623 = vrot.lane.b32.xlu0 %v583, 127
        %v624 = vpop.permute.xlu0 %623
        %625 = vrot.lane.b32.xlu0 %v584, 127
        %v626 = vpop.permute.xlu0 %625
        %627 = vrot.lane.b32.xlu0 %v585, 127
        %v628 = vpop.permute.xlu0 %627
        %629 = vrot.lane.b32.xlu0 %v586, 127
        %v630 = vpop.permute.xlu0 %629
        %631 = vrot.lane.b32.xlu0 %v587, 127
        %v632 = vpop.permute.xlu0 %631
        %633 = vrot.lane.b32.xlu0 %v588, 127
        %v634 = vpop.permute.xlu0 %633
        %635 = vrot.lane.b32.xlu0 %v589, 127
        %v636 = vpop.permute.xlu0 %635
        %637 = vrot.lane.b32.xlu0 %v590, 127
        %v638 = vpop.permute.xlu0 %637
        %639 = vrot.lane.b32.xlu0 %v591, 127
        %v640 = vpop.permute.xlu0 %639
        %vm641 = vcmask 1039360
        %v642 = vsel %vm641, %v622, %v624
        %v643 = vsel %vm641, %v626, %v628
        %v644 = vsel %vm641, %v630, %v632
        %v645 = vsel %vm641, %v634, %v636
        %v646 = vsel %vm641, %v638, %v640
        %vm652 = vcmask 654336
        %v654 = vsel %vm652, %v609, 0
        %v657 = vsel %vm652, %v610, 0
        %659 = vmatprep.subr.bf16.mxu0 0
        %660 = vmatpush1.bf16.msra.mxu0 0
        %661 = vmatprep.subr.bf16.mxu0 0
        %662 = vmatpush1.bf16.msra.mxu0 0
        %663 = vmatprep.subr.bf16.mxu0 0
        %664 = vmatpush1.bf16.msra.mxu0 0
        %665 = vmatprep.subr.bf16.mxu0 0
        %666 = vmatpush1.bf16.msra.mxu0 %v646
        %667 = vmatprep.subr.bf16.mxu0 0
        %668 = vmatpush1.bf16.msra.mxu0 %v645
        %669 = vmatprep.subr.bf16.mxu0 0
        %670 = vmatpush1.bf16.msra.mxu0 %v644
        %671 = vmatprep.subr.bf16.mxu0 0
        %672 = vmatpush1.bf16.msra.mxu0 %v643
        %673 = vmatprep.subr.bf16.mxu0 0
        %674 = vmatpush1.bf16.msra.mxu0 %v642
        %675 = vmatprep.subr.bf16.mxu0 0
        %676 = vmatpush2.bf16.msra.mxu0 0
        %677 = vmatprep.subr.bf16.mxu0 0
        %678 = vmatpush2.bf16.msra.mxu0 0
        %679 = vmatprep.subr.bf16.mxu0 0
        %680 = vmatpush2.bf16.msra.mxu0 0
        %681 = vmatprep.subr.bf16.mxu0 0
        %682 = vmatpush2.bf16.msra.mxu0 0
        %683 = vmatprep.subr.bf16.mxu0 0
        %684 = vmatpush2.bf16.msra.mxu0 0
        %685 = vmatprep.subr.bf16.mxu0 0
        %686 = vmatpush2.bf16.msra.mxu0 0
        %687 = vmatprep.subr.bf16.mxu0 0
        %688 = vmatpush2.bf16.msra.mxu0 0
        %689 = vmatprep.subr.bf16.mxu0 0
        %690 = vmatpush2.bf16.msra.mxu0 0
        %691 = vmatprep.mubr.bf16.mxu0 0
        %692 = vmatmul.mubr.bf16.gmra.mxu0 %v654
        %v693 = vpop.f32.mrf.mxu0
        %v694 = vadd.f32 0.0, %v693
        %v695 = vpop.f32.mrf.mxu0
        %v696 = vpop.f32.mrf.mxu0
        %v697 = vadd.f32 0.0, %v696
        %v698 = vpop.f32.mrf.mxu0
        %699 = vmatprep.mubr.bf16.mxu0 0
        %700 = vmatmul.mubr.bf16.gmra.mxu0 %v657
        %v701 = vpop.f32.mrf.mxu0
        %v702 = vadd.f32 0.0, %v701
        %v703 = vpop.f32.mrf.mxu0
        %v704 = vpop.f32.mrf.mxu0
        %v705 = vadd.f32 0.0, %v704
        %v706 = vpop.f32.mrf.mxu0
        %707 = vdwg.mxu0
        %v712 = vunpack.c.l.b16 %v592
        %v713 = vunpack.c.l.b16 %v593
        %v714 = vunpack.c.l.b16 %v594
        %v715 = vunpack.c.l.b16 %v595
        %v716 = vpack.c.b16 %v713, %v712
        %v717 = vpack.c.b16 %v715, %v714
        %v719 = vsel %vm652, %v716, 0
        %v722 = vsel %vm652, %v717, 0
        %724 = vmatprep.subr.bf16.mxu0 0
        %725 = vmatpush1.bf16.msra.mxu0 0
        %726 = vmatprep.subr.bf16.mxu0 0
        %727 = vmatpush1.bf16.msra.mxu0 0
        %728 = vmatprep.subr.bf16.mxu0 0
        %729 = vmatpush1.bf16.msra.mxu0 0
        %730 = vmatprep.subr.bf16.mxu0 0
        %731 = vmatpush1.bf16.msra.mxu0 %v590
        %732 = vmatprep.subr.bf16.mxu0 0
        %733 = vmatpush1.bf16.msra.mxu0 %v588
        %734 = vmatprep.subr.bf16.mxu0 0
        %735 = vmatpush1.bf16.msra.mxu0 %v586
        %736 = vmatprep.subr.bf16.mxu0 0
        %737 = vmatpush1.bf16.msra.mxu0 %v584
        %738 = vmatprep.subr.bf16.mxu0 0
        %739 = vmatpush1.bf16.msra.mxu0 %v582
        %740 = vmatprep.subr.bf16.mxu0 0
        %741 = vmatpush2.bf16.msra.mxu0 0
        %742 = vmatprep.subr.bf16.mxu0 0
        %743 = vmatpush2.bf16.msra.mxu0 0
        %744 = vmatprep.subr.bf16.mxu0 0
        %745 = vmatpush2.bf16.msra.mxu0 0
        %746 = vmatprep.subr.bf16.mxu0 0
        %747 = vmatpush2.bf16.msra.mxu0 0
        %748 = vmatprep.subr.bf16.mxu0 0
        %749 = vmatpush2.bf16.msra.mxu0 0
        %750 = vmatprep.subr.bf16.mxu0 0
        %751 = vmatpush2.bf16.msra.mxu0 0
        %752 = vmatprep.subr.bf16.mxu0 0
        %753 = vmatpush2.bf16.msra.mxu0 0
        %754 = vmatprep.subr.bf16.mxu0 0
        %755 = vmatpush2.bf16.msra.mxu0 0
        %756 = vmatprep.mubr.bf16.mxu0 0
        %757 = vmatmul.mubr.bf16.gmra.mxu0 %v719
        %v758 = vpop.f32.mrf.mxu0
        %v759 = vadd.f32 %v694, %v758
        %v760 = vpop.f32.mrf.mxu0
        %v761 = vpop.f32.mrf.mxu0
        %v762 = vadd.f32 %v697, %v761
        %v763 = vpop.f32.mrf.mxu0
        %764 = vmatprep.mubr.bf16.mxu0 0
        %765 = vmatmul.mubr.bf16.gmra.mxu0 %v722
        %v766 = vpop.f32.mrf.mxu0
        %v767 = vadd.f32 %v702, %v766
        %v768 = vpop.f32.mrf.mxu0
        %v769 = vpop.f32.mrf.mxu0
        %v770 = vadd.f32 %v705, %v769
        %v771 = vpop.f32.mrf.mxu0
        %772 = vdwg.mxu0
        %s773 = scalar_lea.vmem [#allocation8], 32
        %v774 = vld [vmem:[%s773] sm:$0xf]
        %v775 = vld [vmem:[%s773 + $0x4] sm:$0xf]
        %v776 = vld [vmem:[%s773 + $0x8] sm:$0xf]
        %v777 = vld [vmem:[%s773 + $0xc] sm:$0xf]
        %v782 = vunpack.c.l.b16 %v774
        %v783 = vunpack.c.l.b16 %v775
        %v784 = vunpack.c.l.b16 %v776
        %v785 = vunpack.c.l.b16 %v777
        %v786 = vpack.c.b16 %v783, %v782
        %v787 = vpack.c.b16 %v785, %v784
        %788 = vrot.lane.b32.xlu0 %v582, 126
        %v789 = vpop.permute.xlu0 %788
        %790 = vrot.lane.b32.xlu0 %v583, 126
        %v791 = vpop.permute.xlu0 %790
        %792 = vrot.lane.b32.xlu0 %v584, 126
        %v793 = vpop.permute.xlu0 %792
        %794 = vrot.lane.b32.xlu0 %v585, 126
        %v795 = vpop.permute.xlu0 %794
        %796 = vrot.lane.b32.xlu0 %v586, 126
        %v797 = vpop.permute.xlu0 %796
        %798 = vrot.lane.b32.xlu0 %v587, 126
        %v799 = vpop.permute.xlu0 %798
        %800 = vrot.lane.b32.xlu0 %v588, 126
        %v801 = vpop.permute.xlu0 %800
        %802 = vrot.lane.b32.xlu0 %v589, 126
        %v803 = vpop.permute.xlu0 %802
        %804 = vrot.lane.b32.xlu0 %v590, 126
        %v805 = vpop.permute.xlu0 %804
        %806 = vrot.lane.b32.xlu0 %v591, 126
        %v807 = vpop.permute.xlu0 %806
        %vm808 = vcmask 1031168
        %v809 = vsel %vm808, %v789, %v791
        %v810 = vsel %vm808, %v793, %v795
        %v811 = vsel %vm808, %v797, %v799
        %v812 = vsel %vm808, %v801, %v803
        %v813 = vsel %vm808, %v805, %v807
        %v820 = vsel %vm652, %v786, 0
        %v823 = vsel %vm652, %v787, 0
        %825 = vmatprep.subr.bf16.mxu0 0
        %826 = vmatpush1.bf16.msra.mxu0 0
        %827 = vmatprep.subr.bf16.mxu0 0
        %828 = vmatpush1.bf16.msra.mxu0 0
        %829 = vmatprep.subr.bf16.mxu0 0
        %830 = vmatpush1.bf16.msra.mxu0 0
        %831 = vmatprep.subr.bf16.mxu0 0
        %832 = vmatpush1.bf16.msra.mxu0 %v813
        %833 = vmatprep.subr.bf16.mxu0 0
        %834 = vmatpush1.bf16.msra.mxu0 %v812
        %835 = vmatprep.subr.bf16.mxu0 0
        %836 = vmatpush1.bf16.msra.mxu0 %v811
        %837 = vmatprep.subr.bf16.mxu0 0
        %838 = vmatpush1.bf16.msra.mxu0 %v810
        %839 = vmatprep.subr.bf16.mxu0 0
        %840 = vmatpush1.bf16.msra.mxu0 %v809
        %841 = vmatprep.subr.bf16.mxu0 0
        %842 = vmatpush2.bf16.msra.mxu0 0
        %843 = vmatprep.subr.bf16.mxu0 0
        %844 = vmatpush2.bf16.msra.mxu0 0
        %845 = vmatprep.subr.bf16.mxu0 0
        %846 = vmatpush2.bf16.msra.mxu0 0
        %847 = vmatprep.subr.bf16.mxu0 0
        %848 = vmatpush2.bf16.msra.mxu0 0
        %849 = vmatprep.subr.bf16.mxu0 0
        %850 = vmatpush2.bf16.msra.mxu0 0
        %851 = vmatprep.subr.bf16.mxu0 0
        %852 = vmatpush2.bf16.msra.mxu0 0
        %853 = vmatprep.subr.bf16.mxu0 0
        %854 = vmatpush2.bf16.msra.mxu0 0
        %855 = vmatprep.subr.bf16.mxu0 0
        %856 = vmatpush2.bf16.msra.mxu0 0
        %857 = vmatprep.mubr.bf16.mxu0 0
        %858 = vmatmul.mubr.bf16.gmra.mxu0 %v820
        %v859 = vpop.f32.mrf.mxu0
        %v860 = vadd.f32 0.0, %v859
        %v861 = vpop.f32.mrf.mxu0
        %v862 = vpop.f32.mrf.mxu0
        %v863 = vadd.f32 0.0, %v862
        %v864 = vpop.f32.mrf.mxu0
        %865 = vmatprep.mubr.bf16.mxu0 0
        %866 = vmatmul.mubr.bf16.gmra.mxu0 %v823
        %v867 = vpop.f32.mrf.mxu0
        %v868 = vadd.f32 0.0, %v867
        %v869 = vpop.f32.mrf.mxu0
        %v870 = vpop.f32.mrf.mxu0
        %v871 = vadd.f32 0.0, %v870
        %v872 = vpop.f32.mrf.mxu0
        %873 = vdwg.mxu0
        %v874 = vadd.f32 %v759, %v860
        %v875 = vadd.f32 %v762, %v863
        %v876 = vadd.f32 %v767, %v868
        %v877 = vadd.f32 %v770, %v871
        %s878 = scalar_lea.vmem [#allocation8], 48
        %v879 = vld [vmem:[%s878] sm:$0xf]
        %v880 = vld [vmem:[%s878 + $0x4] sm:$0xf]
        %v881 = vld [vmem:[%s878 + $0x8] sm:$0xf]
        %v882 = vld [vmem:[%s878 + $0xc] sm:$0xf]
        %v887 = vunpack.c.l.b16 %v879
        %v888 = vunpack.c.l.b16 %v880
        %v889 = vunpack.c.l.b16 %v881
        %v890 = vunpack.c.l.b16 %v882
        %v891 = vpack.c.b16 %v888, %v887
        %v892 = vpack.c.b16 %v890, %v889
        %893 = vrot.lane.b32.xlu0 %v582, 125
        %v894 = vpop.permute.xlu0 %893
        %895 = vrot.lane.b32.xlu0 %v583, 125
        %v896 = vpop.permute.xlu0 %895
        %897 = vrot.lane.b32.xlu0 %v584, 125
        %v898 = vpop.permute.xlu0 %897
        %899 = vrot.lane.b32.xlu0 %v585, 125
        %v900 = vpop.permute.xlu0 %899
        %901 = vrot.lane.b32.xlu0 %v586, 125
        %v902 = vpop.permute.xlu0 %901
        %903 = vrot.lane.b32.xlu0 %v587, 125
        %v904 = vpop.permute.xlu0 %903
        %905 = vrot.lane.b32.xlu0 %v588, 125
        %v906 = vpop.permute.xlu0 %905
        %907 = vrot.lane.b32.xlu0 %v589, 125
        %v908 = vpop.permute.xlu0 %907
        %909 = vrot.lane.b32.xlu0 %v590, 125
        %v910 = vpop.permute.xlu0 %909
        %911 = vrot.lane.b32.xlu0 %v591, 125
        %v912 = vpop.permute.xlu0 %911
        %vm913 = vcmask 1022976
        %v914 = vsel %vm913, %v894, %v896
        %v915 = vsel %vm913, %v898, %v900
        %v916 = vsel %vm913, %v902, %v904
        %v917 = vsel %vm913, %v906, %v908
        %v918 = vsel %vm913, %v910, %v912
        %v925 = vsel %vm652, %v891, 0
        %v928 = vsel %vm652, %v892, 0
        %930 = vmatprep.subr.bf16.mxu0 0
        %931 = vmatpush1.bf16.msra.mxu0 0
        %932 = vmatprep.subr.bf16.mxu0 0
        %933 = vmatpush1.bf16.msra.mxu0 0
        %934 = vmatprep.subr.bf16.mxu0 0
        %935 = vmatpush1.bf16.msra.mxu0 0
        %936 = vmatprep.subr.bf16.mxu0 0
        %937 = vmatpush1.bf16.msra.mxu0 %v918
        %938 = vmatprep.subr.bf16.mxu0 0
        %939 = vmatpush1.bf16.msra.mxu0 %v917
        %940 = vmatprep.subr.bf16.mxu0 0
        %941 = vmatpush1.bf16.msra.mxu0 %v916
        %942 = vmatprep.subr.bf16.mxu0 0
        %943 = vmatpush1.bf16.msra.mxu0 %v915
        %944 = vmatprep.subr.bf16.mxu0 0
        %945 = vmatpush1.bf16.msra.mxu0 %v914
        %946 = vmatprep.subr.bf16.mxu0 0
        %947 = vmatpush2.bf16.msra.mxu0 0
        %948 = vmatprep.subr.bf16.mxu0 0
        %949 = vmatpush2.bf16.msra.mxu0 0
        %950 = vmatprep.subr.bf16.mxu0 0
        %951 = vmatpush2.bf16.msra.mxu0 0
        %952 = vmatprep.subr.bf16.mxu0 0
        %953 = vmatpush2.bf16.msra.mxu0 0
        %954 = vmatprep.subr.bf16.mxu0 0
        %955 = vmatpush2.bf16.msra.mxu0 0
        %956 = vmatprep.subr.bf16.mxu0 0
        %957 = vmatpush2.bf16.msra.mxu0 0
        %958 = vmatprep.subr.bf16.mxu0 0
        %959 = vmatpush2.bf16.msra.mxu0 0
        %960 = vmatprep.subr.bf16.mxu0 0
        %961 = vmatpush2.bf16.msra.mxu0 0
        %962 = vmatprep.mubr.bf16.mxu0 0
        %963 = vmatmul.mubr.bf16.gmra.mxu0 %v925
        %v964 = vpop.f32.mrf.mxu0
        %v965 = vadd.f32 0.0, %v964
        %v966 = vpop.f32.mrf.mxu0
        %v967 = vpop.f32.mrf.mxu0
        %v968 = vadd.f32 0.0, %v967
        %v969 = vpop.f32.mrf.mxu0
        %970 = vmatprep.mubr.bf16.mxu0 0
        %971 = vmatmul.mubr.bf16.gmra.mxu0 %v928
        %v972 = vpop.f32.mrf.mxu0
        %v973 = vadd.f32 0.0, %v972
        %v974 = vpop.f32.mrf.mxu0
        %v975 = vpop.f32.mrf.mxu0
        %v976 = vadd.f32 0.0, %v975
        %v977 = vpop.f32.mrf.mxu0
        %978 = vdwg.mxu0
        %v979 = vadd.f32 %v874, %v965
        %v980 = vadd.f32 %v875, %v968
        %v981 = vadd.f32 %v876, %v973
        %v982 = vadd.f32 %v877, %v976
        %s983 = scalar_lea.vmem [#allocation8], 64
        %v984 = vld [vmem:[%s983] sm:$0xf]
        %v985 = vld [vmem:[%s983 + $0x4] sm:$0xf]
        %v986 = vld [vmem:[%s983 + $0x8] sm:$0xf]
        %v987 = vld [vmem:[%s983 + $0xc] sm:$0xf]
        %v992 = vunpack.c.l.b16 %v984
        %v993 = vunpack.c.l.b16 %v985
        %v994 = vunpack.c.l.b16 %v986
        %v995 = vunpack.c.l.b16 %v987
        %v996 = vpack.c.b16 %v993, %v992
        %v997 = vpack.c.b16 %v995, %v994
        %998 = vrot.lane.b32.xlu0 %v582, 124
        %v999 = vpop.permute.xlu0 %998
        %1000 = vrot.lane.b32.xlu0 %v583, 124
        %v1001 = vpop.permute.xlu0 %1000
        %1002 = vrot.lane.b32.xlu0 %v584, 124
        %v1003 = vpop.permute.xlu0 %1002
        %1004 = vrot.lane.b32.xlu0 %v585, 124
        %v1005 = vpop.permute.xlu0 %1004
        %1006 = vrot.lane.b32.xlu0 %v586, 124
        %v1007 = vpop.permute.xlu0 %1006
        %1008 = vrot.lane.b32.xlu0 %v587, 124
        %v1009 = vpop.permute.xlu0 %1008
        %1010 = vrot.lane.b32.xlu0 %v588, 124
        %v1011 = vpop.permute.xlu0 %1010
        %1012 = vrot.lane.b32.xlu0 %v589, 124
        %v1013 = vpop.permute.xlu0 %1012
        %1014 = vrot.lane.b32.xlu0 %v590, 124
        %v1015 = vpop.permute.xlu0 %1014
        %1016 = vrot.lane.b32.xlu0 %v591, 124
        %v1017 = vpop.permute.xlu0 %1016
        %vm1018 = vcmask 1014784
        %v1019 = vsel %vm1018, %v999, %v1001
        %v1020 = vsel %vm1018, %v1003, %v1005
        %v1021 = vsel %vm1018, %v1007, %v1009
        %v1022 = vsel %vm1018, %v1011, %v1013
        %v1023 = vsel %vm1018, %v1015, %v1017
        %v1030 = vsel %vm652, %v996, 0
        %v1033 = vsel %vm652, %v997, 0
        %1035 = vmatprep.subr.bf16.mxu0 0
        %1036 = vmatpush1.bf16.msra.mxu0 0
        %1037 = vmatprep.subr.bf16.mxu0 0
        %1038 = vmatpush1.bf16.msra.mxu0 0
        %1039 = vmatprep.subr.bf16.mxu0 0
        %1040 = vmatpush1.bf16.msra.mxu0 0
        %1041 = vmatprep.subr.bf16.mxu0 0
        %1042 = vmatpush1.bf16.msra.mxu0 %v1023
        %1043 = vmatprep.subr.bf16.mxu0 0
        %1044 = vmatpush1.bf16.msra.mxu0 %v1022
        %1045 = vmatprep.subr.bf16.mxu0 0
        %1046 = vmatpush1.bf16.msra.mxu0 %v1021
        %1047 = vmatprep.subr.bf16.mxu0 0
        %1048 = vmatpush1.bf16.msra.mxu0 %v1020
        %1049 = vmatprep.subr.bf16.mxu0 0
        %1050 = vmatpush1.bf16.msra.mxu0 %v1019
        %1051 = vmatprep.subr.bf16.mxu0 0
        %1052 = vmatpush2.bf16.msra.mxu0 0
        %1053 = vmatprep.subr.bf16.mxu0 0
        %1054 = vmatpush2.bf16.msra.mxu0 0
        %1055 = vmatprep.subr.bf16.mxu0 0
        %1056 = vmatpush2.bf16.msra.mxu0 0
        %1057 = vmatprep.subr.bf16.mxu0 0
        %1058 = vmatpush2.bf16.msra.mxu0 0
        %1059 = vmatprep.subr.bf16.mxu0 0
        %1060 = vmatpush2.bf16.msra.mxu0 0
        %1061 = vmatprep.subr.bf16.mxu0 0
        %1062 = vmatpush2.bf16.msra.mxu0 0
        %1063 = vmatprep.subr.bf16.mxu0 0
        %1064 = vmatpush2.bf16.msra.mxu0 0
        %1065 = vmatprep.subr.bf16.mxu0 0
        %1066 = vmatpush2.bf16.msra.mxu0 0
        %1067 = vmatprep.mubr.bf16.mxu0 0
        %1068 = vmatmul.mubr.bf16.gmra.mxu0 %v1030
        %v1069 = vpop.f32.mrf.mxu0
        %v1070 = vadd.f32 0.0, %v1069
        %v1071 = vpop.f32.mrf.mxu0
        %v1072 = vpop.f32.mrf.mxu0
        %v1073 = vadd.f32 0.0, %v1072
        %v1074 = vpop.f32.mrf.mxu0
        %1075 = vmatprep.mubr.bf16.mxu0 0
        %1076 = vmatmul.mubr.bf16.gmra.mxu0 %v1033
        %v1077 = vpop.f32.mrf.mxu0
        %v1078 = vadd.f32 0.0, %v1077
        %v1079 = vpop.f32.mrf.mxu0
        %v1080 = vpop.f32.mrf.mxu0
        %v1081 = vadd.f32 0.0, %v1080
        %v1082 = vpop.f32.mrf.mxu0
        %1083 = vdwg.mxu0
        %v1084 = vadd.f32 %v979, %v1070
        %v1085 = vadd.f32 %v980, %v1073
        %v1086 = vadd.f32 %v981, %v1078
        %v1087 = vadd.f32 %v982, %v1081
        %s1088 = scalar_lea.vmem [#allocation8], 80
        %v1089 = vld [vmem:[%s1088] sm:$0xf]
        %v1090 = vld [vmem:[%s1088 + $0x4] sm:$0xf]
        %v1091 = vld [vmem:[%s1088 + $0x8] sm:$0xf]
        %v1092 = vld [vmem:[%s1088 + $0xc] sm:$0xf]
        %v1097 = vunpack.c.l.b16 %v1089
        %v1098 = vunpack.c.l.b16 %v1090
        %v1099 = vunpack.c.l.b16 %v1091
        %v1100 = vunpack.c.l.b16 %v1092
        %v1101 = vpack.c.b16 %v1098, %v1097
        %v1102 = vpack.c.b16 %v1100, %v1099
        %1103 = vrot.lane.b32.xlu0 %v582, 123
        %v1104 = vpop.permute.xlu0 %1103
        %1105 = vrot.lane.b32.xlu0 %v583, 123
        %v1106 = vpop.permute.xlu0 %1105
        %1107 = vrot.lane.b32.xlu0 %v584, 123
        %v1108 = vpop.permute.xlu0 %1107
        %1109 = vrot.lane.b32.xlu0 %v585, 123
        %v1110 = vpop.permute.xlu0 %1109
        %1111 = vrot.lane.b32.xlu0 %v586, 123
        %v1112 = vpop.permute.xlu0 %1111
        %1113 = vrot.lane.b32.xlu0 %v587, 123
        %v1114 = vpop.permute.xlu0 %1113
        %1115 = vrot.lane.b32.xlu0 %v588, 123
        %v1116 = vpop.permute.xlu0 %1115
        %1117 = vrot.lane.b32.xlu0 %v589, 123
        %v1118 = vpop.permute.xlu0 %1117
        %1119 = vrot.lane.b32.xlu0 %v590, 123
        %v1120 = vpop.permute.xlu0 %1119
        %1121 = vrot.lane.b32.xlu0 %v591, 123
        %v1122 = vpop.permute.xlu0 %1121
        %vm1123 = vcmask 1006592
        %v1124 = vsel %vm1123, %v1104, %v1106
        %v1125 = vsel %vm1123, %v1108, %v1110
        %v1126 = vsel %vm1123, %v1112, %v1114
        %v1127 = vsel %vm1123, %v1116, %v1118
        %v1128 = vsel %vm1123, %v1120, %v1122
        %v1135 = vsel %vm652, %v1101, 0
        %v1138 = vsel %vm652, %v1102, 0
        %1140 = vmatprep.subr.bf16.mxu0 0
        %1141 = vmatpush1.bf16.msra.mxu0 0
        %1142 = vmatprep.subr.bf16.mxu0 0
        %1143 = vmatpush1.bf16.msra.mxu0 0
        %1144 = vmatprep.subr.bf16.mxu0 0
        %1145 = vmatpush1.bf16.msra.mxu0 0
        %1146 = vmatprep.subr.bf16.mxu0 0
        %1147 = vmatpush1.bf16.msra.mxu0 %v1128
        %1148 = vmatprep.subr.bf16.mxu0 0
        %1149 = vmatpush1.bf16.msra.mxu0 %v1127
        %1150 = vmatprep.subr.bf16.mxu0 0
        %1151 = vmatpush1.bf16.msra.mxu0 %v1126
        %1152 = vmatprep.subr.bf16.mxu0 0
        %1153 = vmatpush1.bf16.msra.mxu0 %v1125
        %1154 = vmatprep.subr.bf16.mxu0 0
        %1155 = vmatpush1.bf16.msra.mxu0 %v1124
        %1156 = vmatprep.subr.bf16.mxu0 0
        %1157 = vmatpush2.bf16.msra.mxu0 0
        %1158 = vmatprep.subr.bf16.mxu0 0
        %1159 = vmatpush2.bf16.msra.mxu0 0
        %1160 = vmatprep.subr.bf16.mxu0 0
        %1161 = vmatpush2.bf16.msra.mxu0 0
        %1162 = vmatprep.subr.bf16.mxu0 0
        %1163 = vmatpush2.bf16.msra.mxu0 0
        %1164 = vmatprep.subr.bf16.mxu0 0
        %1165 = vmatpush2.bf16.msra.mxu0 0
        %1166 = vmatprep.subr.bf16.mxu0 0
        %1167 = vmatpush2.bf16.msra.mxu0 0
        %1168 = vmatprep.subr.bf16.mxu0 0
        %1169 = vmatpush2.bf16.msra.mxu0 0
        %1170 = vmatprep.subr.bf16.mxu0 0
        %1171 = vmatpush2.bf16.msra.mxu0 0
        %1172 = vmatprep.mubr.bf16.mxu0 0
        %1173 = vmatmul.mubr.bf16.gmra.mxu0 %v1135
        %v1174 = vpop.f32.mrf.mxu0
        %v1175 = vadd.f32 0.0, %v1174
        %v1176 = vpop.f32.mrf.mxu0
        %v1177 = vpop.f32.mrf.mxu0
        %v1178 = vadd.f32 0.0, %v1177
        %v1179 = vpop.f32.mrf.mxu0
        %1180 = vmatprep.mubr.bf16.mxu0 0
        %1181 = vmatmul.mubr.bf16.gmra.mxu0 %v1138
        %v1182 = vpop.f32.mrf.mxu0
        %v1183 = vadd.f32 0.0, %v1182
        %v1184 = vpop.f32.mrf.mxu0
        %v1185 = vpop.f32.mrf.mxu0
        %v1186 = vadd.f32 0.0, %v1185
        %v1187 = vpop.f32.mrf.mxu0
        %1188 = vdwg.mxu0
        %v1189 = vadd.f32 %v1084, %v1175
        %v1190 = vadd.f32 %v1085, %v1178
        %v1191 = vadd.f32 %v1086, %v1183
        %v1192 = vadd.f32 %v1087, %v1186
        %s1193 = scalar_lea.vmem [#allocation8], 96
        %v1194 = vld [vmem:[%s1193] sm:$0xf]
        %v1195 = vld [vmem:[%s1193 + $0x4] sm:$0xf]
        %v1196 = vld [vmem:[%s1193 + $0x8] sm:$0xf]
        %v1197 = vld [vmem:[%s1193 + $0xc] sm:$0xf]
        %v1202 = vunpack.c.l.b16 %v1194
        %v1203 = vunpack.c.l.b16 %v1195
        %v1204 = vunpack.c.l.b16 %v1196
        %v1205 = vunpack.c.l.b16 %v1197
        %v1206 = vpack.c.b16 %v1203, %v1202
        %v1207 = vpack.c.b16 %v1205, %v1204
        %1208 = vrot.lane.b32.xlu0 %v582, 122
        %v1209 = vpop.permute.xlu0 %1208
        %1210 = vrot.lane.b32.xlu0 %v583, 122
        %v1211 = vpop.permute.xlu0 %1210
        %1212 = vrot.lane.b32.xlu0 %v584, 122
        %v1213 = vpop.permute.xlu0 %1212
        %1214 = vrot.lane.b32.xlu0 %v585, 122
        %v1215 = vpop.permute.xlu0 %1214
        %1216 = vrot.lane.b32.xlu0 %v586, 122
        %v1217 = vpop.permute.xlu0 %1216
        %1218 = vrot.lane.b32.xlu0 %v587, 122
        %v1219 = vpop.permute.xlu0 %1218
        %1220 = vrot.lane.b32.xlu0 %v588, 122
        %v1221 = vpop.permute.xlu0 %1220
        %1222 = vrot.lane.b32.xlu0 %v589, 122
        %v1223 = vpop.permute.xlu0 %1222
        %1224 = vrot.lane.b32.xlu0 %v590, 122
        %v1225 = vpop.permute.xlu0 %1224
        %1226 = vrot.lane.b32.xlu0 %v591, 122
        %v1227 = vpop.permute.xlu0 %1226
        %vm1228 = vcmask 998400
        %v1229 = vsel %vm1228, %v1209, %v1211
        %v1230 = vsel %vm1228, %v1213, %v1215
        %v1231 = vsel %vm1228, %v1217, %v1219
        %v1232 = vsel %vm1228, %v1221, %v1223
        %v1233 = vsel %vm1228, %v1225, %v1227
        %v1240 = vsel %vm652, %v1206, 0
        %v1243 = vsel %vm652, %v1207, 0
        %1245 = vmatprep.subr.bf16.mxu0 0
        %1246 = vmatpush1.bf16.msra.mxu0 0
        %1247 = vmatprep.subr.bf16.mxu0 0
        %1248 = vmatpush1.bf16.msra.mxu0 0
        %1249 = vmatprep.subr.bf16.mxu0 0
        %1250 = vmatpush1.bf16.msra.mxu0 0
        %1251 = vmatprep.subr.bf16.mxu0 0
        %1252 = vmatpush1.bf16.msra.mxu0 %v1233
        %1253 = vmatprep.subr.bf16.mxu0 0
        %1254 = vmatpush1.bf16.msra.mxu0 %v1232
        %1255 = vmatprep.subr.bf16.mxu0 0
        %1256 = vmatpush1.bf16.msra.mxu0 %v1231
        %1257 = vmatprep.subr.bf16.mxu0 0
        %1258 = vmatpush1.bf16.msra.mxu0 %v1230
        %1259 = vmatprep.subr.bf16.mxu0 0
        %1260 = vmatpush1.bf16.msra.mxu0 %v1229
        %1261 = vmatprep.subr.bf16.mxu0 0
        %1262 = vmatpush2.bf16.msra.mxu0 0
        %1263 = vmatprep.subr.bf16.mxu0 0
        %1264 = vmatpush2.bf16.msra.mxu0 0
        %1265 = vmatprep.subr.bf16.mxu0 0
        %1266 = vmatpush2.bf16.msra.mxu0 0
        %1267 = vmatprep.subr.bf16.mxu0 0
        %1268 = vmatpush2.bf16.msra.mxu0 0
        %1269 = vmatprep.subr.bf16.mxu0 0
        %1270 = vmatpush2.bf16.msra.mxu0 0
        %1271 = vmatprep.subr.bf16.mxu0 0
        %1272 = vmatpush2.bf16.msra.mxu0 0
        %1273 = vmatprep.subr.bf16.mxu0 0
        %1274 = vmatpush2.bf16.msra.mxu0 0
        %1275 = vmatprep.subr.bf16.mxu0 0
        %1276 = vmatpush2.bf16.msra.mxu0 0
        %1277 = vmatprep.mubr.bf16.mxu0 0
        %1278 = vmatmul.mubr.bf16.gmra.mxu0 %v1240
        %v1279 = vpop.f32.mrf.mxu0
        %v1280 = vadd.f32 0.0, %v1279
        %v1281 = vpop.f32.mrf.mxu0
        %v1282 = vpop.f32.mrf.mxu0
        %v1283 = vadd.f32 0.0, %v1282
        %v1284 = vpop.f32.mrf.mxu0
        %1285 = vmatprep.mubr.bf16.mxu0 0
        %1286 = vmatmul.mubr.bf16.gmra.mxu0 %v1243
        %v1287 = vpop.f32.mrf.mxu0
        %v1288 = vadd.f32 0.0, %v1287
        %v1289 = vpop.f32.mrf.mxu0
        %v1290 = vpop.f32.mrf.mxu0
        %v1291 = vadd.f32 0.0, %v1290
        %v1292 = vpop.f32.mrf.mxu0
        %1293 = vdwg.mxu0
        %v1294 = vadd.f32 %v1189, %v1280
        %v1295 = vadd.f32 %v1190, %v1283
        %v1296 = vadd.f32 %v1191, %v1288
        %v1297 = vadd.f32 %v1192, %v1291
        %v1298 = vld [vmem:[%s4] sm:$0xff]
        %v1299 = vld [vmem:[%s4 + $0x8] sm:$0xff]
        %v1300 = vld [vmem:[%s4 + $0x10] sm:$0xff]
        %v1301 = vld [vmem:[%s4 + $0x18] sm:$0xff]
        %1303 = vset.pattern.permute.xlu0 0
        %1304 = vperm.xlu0 %1303, %v1298
        %v1305 = vpop.permute.xlu0 %1304
        %1308 = vset.pattern.permute.xlu0 0
        %1309 = vperm.xlu0 %1308, %v1299
        %v1310 = vpop.permute.xlu0 %1309
        %1313 = vset.pattern.permute.xlu0 0
        %1314 = vperm.xlu0 %1313, %v1300
        %v1315 = vpop.permute.xlu0 %1314
        %1318 = vset.pattern.permute.xlu0 0
        %1319 = vperm.xlu0 %1318, %v1301
        %v1320 = vpop.permute.xlu0 %1319
        %v1322 = vadd.f32 %v1294, %v1305
        %v1323 = vadd.f32 %v1295, %v1310
        %v1324 = vadd.f32 %v1296, %v1315
        %v1325 = vadd.f32 %v1297, %v1320
        %v1326 = vpack.c.bf16 %v1323, %v1322
        %v1327 = vpack.c.bf16 %v1325, %v1324
        %v1330 = vunpack.c.l.b16 %v1326
        %v1331 = vunpack.c.h.b16 %v1326
        %v1332 = vunpack.c.l.b16 %v1327
        %v1333 = vunpack.c.h.b16 %v1327
        %v1334 = vpack.c.b16 %v1330, %v1330
        %v1335 = vpack.c.b16 %v1331, %v1331
        %v1336 = vpack.c.b16 %v1332, %v1332
        %v1337 = vpack.c.b16 %v1333, %v1333
        %1342 = vst [vmem:[%s375] sm:$0xf] %v1334
        %1343 = vst [vmem:[%s375 + $0x4] sm:$0xf] %v1335
        %1344 = vst [vmem:[%s375 + $0x8] sm:$0xf] %v1336
        %1345 = vst [vmem:[%s375 + $0xc] sm:$0xf] %v1337
        %s1346 = sand.u32 %s186, 1
        %s1347 = scalar_lea.sflag [#allocation4], %s1346
        %s1348 = sand.u32 %s186, 1
        %s1349 = smul.addr %s1348, 16
        %s1350 = scalar_lea.vmem [#allocation10], %s1349
        // Predicated region
        $region57: #{tpu_custom_call.1} parent=39 // pred_check
          %p1351 = pneg %p196
        $region58: #{tpu_custom_call.1} parent=39 // pred_check_branch
          %1353 = sbr.rel (%p1351) target = $region60
        $region59: #{tpu_custom_call.1} parent=39 // pred_region
          %s1355 = ssub.s32 256, 256
          %1356 = vsyncadd %s1347, %s1355
          %s1357 = smul.addr %s31, 12
          %s1358 = sadd.s32 %s30, %s1357
          %s1359 = smul.addr %s1358, 64
          %s1360 = scalar_lea.hbm %s5, %s1359
          %s1361 = sshll.u32 %s1350, 4
          %s1362 = int_to_ptr.vmem [resolvable:$true] %s1361
          %1367 = dma.vmem_to_hbm [thread:$0]  %s1362, 256, %s1360, %s1347, 64, 192, 4
        $region60: #{tpu_custom_call.1} parent=39 // pred_fallthru
          _
      $region40: #{tpu_custom_call.1} parent=5 // pred_fallthru
        _
      %p1368 = scmp.le.s32.totalorder 2, %s21
      // Predicated region
      $region61: #{tpu_custom_call.1} parent=5 // pred_check
        %p1369 = pneg %p1368
      $region62: #{tpu_custom_call.1} parent=5 // pred_check_branch
        %1371 = sbr.rel (%p1369) target = $region64
      $region63: #{tpu_custom_call.1} parent=5 // pred_region
        %s1372 = ssub.s32 %s21, 2
        // Predicated region
        $region65: #{tpu_custom_call.1} parent=63 // pred_check
          %p1373 = pneg %p202
        $region66: #{tpu_custom_call.1} parent=63 // pred_check_branch
          %1375 = sbr.rel (%p1373) target = $region68
        $region67: #{tpu_custom_call.1} parent=63 // pred_region
          %s1376 = sand.u32 %s187, 1
          %s1377 = scalar_lea.sflag [#allocation4], %s1376
          %s1378 = sand.u32 %s187, 1
          %s1379 = smul.addr %s1378, 16
          %s1380 = scalar_lea.vmem [#allocation10], %s1379
          %1381 = dma.done %s1377, 256
        $region68: #{tpu_custom_call.1} parent=63 // pred_fallthru
          _
      $region64: #{tpu_custom_call.1} parent=5 // pred_fallthru
        _
    $region6: #{tpu_custom_call.1} parent=1 // loop_footer
      %s25 = sadd.s32 1, %s21
    $region7: #{tpu_custom_call.1} parent=1 // loop_footer_branch
      %20 = sbr.rel target = $region3
    $region8: #{tpu_custom_call.1} parent=1 // loop_exit
      _
    %1382 = vsyncpa [#allocation3], 1
    %s1383 = scalar_lea.sflag [#allocation3], 1
    %1384 = vsyncpa %s1383, 1
    %1385 = vsyncpa [#allocation6], 1
    %s1386 = scalar_lea.sflag [#allocation6], 1
    %1387 = vsyncpa %s1386, 1
    %1388 = vsyncpa [#allocation9], 1
    %1389 = vsyncpa [#allocation4], 1
    %s1390 = scalar_lea.sflag [#allocation4], 1
    %1391 = vsyncpa %s1390, 1

</llo_original>
